<compile_context>
chip_gen: v5e
topology: v5e:2x2
jax: 0.10.0
libtpu: 0.0.40
codegen_flags: <defaults>
</compile_context>

<pallas_src>
import functools

import jax
import jax.numpy as jnp
from jax.experimental import pallas as pl
from jax.experimental.pallas import tpu as pltpu


def lstmnet_kernel(xx_ref,                     # (L*B, 2*Cin)  row t*B+b = [x_t(b) | x_{L-1-t}(b)]
                   w_in_ref,                   # (2*Cin, 8H)   block input weights, gate-major cols
                   b_all_ref,                  # (1, 8H)       biases, gate-major cols
                   whh_blk_ref,                # (2H, 8H)      bf16 block-diag recurrent weights
                   wlin_t_ref,                 # (2H, H)       output Linear weight (transposed)
                   blin_ref,                   # (1, H)
                   out_ref,                    # (B, H)
                   gx_ref,                     # scratch (L*B, 8H) f32
                   hcat_ref,                   # scratch (L*B, 2H) f32  [fwd | bwd] per time row
                   *, L, B, H):
    G = 2 * H

    # ---- 1. Hoisted input projection for both directions (bwd time-reversed into the same
    #         rows), biases folded in.  One lane-dense MXU op, off the serial chain.
    gx_ref[...] = (jnp.dot(xx_ref[...], w_in_ref[...],
                           preferred_element_type=jnp.float32)
                   + b_all_ref[...])

    whh_blk = whh_blk_ref[...]                 # (2H, 8H) bf16, loaded once

    h_cat = jnp.zeros((B, G), jnp.float32)     # [h_f | h_b]
    c_cat = jnp.zeros((B, G), jnp.float32)     # [c_f | c_b]

    # ---- 2. Fused fwd/bwd recurrence, fully unrolled (L static, small).  Serial chain per
    #         step: 1 bf16 MXU dot -> add -> sigmoid/tanh over whole 256-lane gate vector ->
    #         c/h update on (B,2H) -> tanh(c) -> cast.  Stores are off the chain.
    for t in range(L):
        s = L - 1 - t
        gx_t = gx_ref[t * B:(t + 1) * B, :]                      # (B, 8H), both directions
        gates = gx_t + jnp.dot(h_cat.astype(jnp.bfloat16), whh_blk,
                               preferred_element_type=jnp.float32)
        sg = jax.nn.sigmoid(gates)             # one EUP pass over all gates
        th = jnp.tanh(gates)                   # one EUP pass over all gates
        i_g = sg[:, 0 * G:1 * G]
        f_g = sg[:, 1 * G:2 * G]
        g_g = th[:, 2 * G:3 * G]
        o_g = sg[:, 3 * G:4 * G]
        c_cat = f_g * c_cat + i_g * g_g
        h_cat = o_g * jnp.tanh(c_cat)
        hcat_ref[t * B:(t + 1) * B, 0:H] = h_cat[:, 0:H]         # fwd hidden -> time t
        hcat_ref[s * B:(s + 1) * B, H:G] = h_cat[:, H:G]         # bwd hidden -> time s

    # ---- 3. Output Linear as ONE batched matmul over all timesteps + bias, then
    #         max-over-time as a log2(L) fold-in-half tree (big aligned slices first).
    z = (jnp.dot(hcat_ref[...], wlin_t_ref[...],
                 preferred_element_type=jnp.float32)
         + blin_ref[...])                                        # (L*B, H)
    n = L
    zc = z
    while n > 1:
        half = n // 2
        red = jnp.maximum(zc[0:half * B, :], zc[half * B:2 * half * B, :])
        if n % 2:
            red = jnp.concatenate([red, zc[2 * half * B:n * B, :]], axis=0)
        zc = red
        n = half + (n % 2)
    out_ref[...] = zc


def init_params(key, Cin, H):
    """Deterministic synthetic parameters with PyTorch LSTM weight shapes."""
    bound = 1.0 / float(H) ** 0.5
    ks = jax.random.split(key, 10)

    def u(k, shape):
        return jax.random.uniform(k, shape, jnp.float32, -bound, bound)

    # PyTorch shapes: weight_ih (4H, Cin), weight_hh (4H, H), biases (4H,)
    wih_f = u(ks[0], (4 * H, Cin))
    whh_f = u(ks[1], (4 * H, H))
    b_f = u(ks[2], (4 * H,)) + u(ks[3], (4 * H,))     # b_ih + b_hh
    wih_b = u(ks[4], (4 * H, Cin))
    whh_b = u(ks[5], (4 * H, H))
    b_b = u(ks[6], (4 * H,)) + u(ks[7], (4 * H,))
    wlin = u(ks[8], (H, 2 * H))                        # nn.Linear(2H, H) weight
    blin = u(ks[9], (H,))
    return dict(wih_f=wih_f, whh_f=whh_f, b_f=b_f,
                wih_b=wih_b, whh_b=whh_b, b_b=b_b,
                wlin=wlin, blin=blin)


def _interleave_gates(wf, wb, H):
    """[i,f,g,o] blocks of fwd/bwd (last axis 4H each) -> gate-major interleaved 8H:
    [i_f, i_b, f_f, f_b, g_f, g_b, o_f, o_b]."""
    parts = []
    for g in range(4):
        parts.append(wf[..., g * H:(g + 1) * H])
        parts.append(wb[..., g * H:(g + 1) * H])
    return jnp.concatenate(parts, axis=-1)


@jax.jit
def lstmnet_forward(x, params):
    """x: (B, Cin, L) float32 -> (B, H) float32."""
    B, Cin, L = x.shape
    H = params["whh_f"].shape[1]

    # (B, Cin, L) -> (L, B, Cin); pack x_t and x_{L-1-t} into one row so BOTH directions'
    # input projections come from a single contiguous per-step slice.
    xs = jnp.transpose(x, (2, 0, 1)).astype(jnp.float32)          # (L, B, Cin)
    xx = jnp.concatenate([xs, xs[::-1]], axis=-1).reshape(L * B, 2 * Cin)

    zc = jnp.zeros((Cin, 4 * H), jnp.float32)
    zh = jnp.zeros((H, 4 * H), jnp.float32)

    # Input weights: rows 0:Cin act on x_t (fwd gate columns), rows Cin:2Cin act on
    # x_{L-1-t} (bwd gate columns); gate-type-major interleaved columns.
    w_in = jnp.concatenate([_interleave_gates(params["wih_f"].T, zc, H),
                            _interleave_gates(zc, params["wih_b"].T, H)], axis=0)  # (2Cin, 8H)
    b_all = _interleave_gates(params["b_f"], params["b_b"], H).reshape(1, 8 * H)

    # Block-diagonal recurrent weights: rows 0:H = h_f -> fwd gate cols, rows H:2H = h_b ->
    # bwd gate cols.  Pre-cast to bf16 (MXU-native) — the only bf16 op is on the serial chain.
    whh_blk = jnp.concatenate([_interleave_gates(params["whh_f"].T, zh, H),
                               _interleave_gates(zh, params["whh_b"].T, H)],
                              axis=0).astype(jnp.bfloat16)                          # (2H, 8H)

    wlin_t = params["wlin"].T                    # (2H, H), fwd rows first — matches hcat layout
    blin = params["blin"].reshape(1, H)

    kernel = functools.partial(lstmnet_kernel, L=L, B=B, H=H)
    out = pl.pallas_call(
        kernel,
        out_shape=jax.ShapeDtypeStruct((B, H), jnp.float32),
        scratch_shapes=[
            pltpu.VMEM((L * B, 8 * H), jnp.float32),   # hoisted input projections (both dirs)
            pltpu.VMEM((L * B, 2 * H), jnp.float32),   # merged fwd|bwd hidden states
        ],
    )(xx, w_in, b_all, whh_blk, wlin_t, blin)
    return out


def reference_forward(x, params):
    """Pure-JAX f32 reference implementing the PyTorch forward (eval mode)."""
    B, Cin, L = x.shape
    H = params["whh_f"].shape[1]
    xs = jnp.transpose(x, (2, 0, 1)).astype(jnp.float32)  # (L, B, Cin)

    def cell(xt, h, c, wih, whh, b):
        g = xt @ wih.T + h @ whh.T + b
        i = jax.nn.sigmoid(g[:, :H])
        f = jax.nn.sigmoid(g[:, H:2 * H])
        gg = jnp.tanh(g[:, 2 * H:3 * H])
        o = jax.nn.sigmoid(g[:, 3 * H:])
        c = f * c + i * gg
        h = o * jnp.tanh(c)
        return h, c

    h = jnp.zeros((B, H), jnp.float32)
    c = jnp.zeros((B, H), jnp.float32)
    hf = []
    for t in range(L):
        h, c = cell(xs[t], h, c, params["wih_f"], params["whh_f"], params["b_f"])
        hf.append(h)

    h = jnp.zeros((B, H), jnp.float32)
    c = jnp.zeros((B, H), jnp.float32)
    hb = [None] * L
    for t in range(L - 1, -1, -1):
        h, c = cell(xs[t], h, c, params["wih_b"], params["whh_b"], params["b_b"])
        hb[t] = h

    seq = jnp.stack([jnp.concatenate([hf[t], hb[t]], axis=-1) for t in range(L)], axis=0)
    lin = seq @ params["wlin"].T + params["blin"]        # (L, B, H)
    return jnp.max(lin, axis=0)                          # (B, H)


if __name__ == "__main__":
    B, Cin, L, H = 2, 8, 16, 32

    key = jax.random.PRNGKey(0)
    k_params, k_x = jax.random.split(key)
    params = init_params(k_params, Cin, H)
    x = jax.random.normal(k_x, (B, Cin, L), jnp.float32)

    out = lstmnet_forward(x, params)
    out = jax.block_until_ready(out)

    ref = reference_forward(x, params)
    assert out.shape == (B, H)
    # Tolerance loosened vs. 2e-5: the recurrent matmul uses bf16 operands (f32 accumulate)
    # per the perf review; the f32 reference therefore differs at the ~1e-2 level.
    assert jnp.allclose(out, ref, atol=5e-2, rtol=5e-2), "Pallas kernel mismatch vs reference"

    print("KERNEL_OK")
</pallas_src>

<mosaic_0001>
module attributes {stable_mosaic.version = 11 : i64} {
  func.func @lstmnet_kernel(%arg0: memref<32x16xf32, #tpu.memory_space<vmem>>, %arg1: memref<16x256xf32, #tpu.memory_space<vmem>>, %arg2: memref<1x256xf32, #tpu.memory_space<vmem>>, %arg3: memref<64x256xbf16, #tpu.memory_space<vmem>>, %arg4: memref<64x32xf32, #tpu.memory_space<vmem>>, %arg5: memref<1x32xf32, #tpu.memory_space<vmem>>, %arg6: memref<2x32xf32, #tpu.memory_space<vmem>>, %arg7: memref<32x256xf32, #tpu.memory_space<vmem>>, %arg8: memref<32x64xf32, #tpu.memory_space<vmem>>) attributes {dimension_semantics = [], scalar_prefetch = 0 : i64, scratch_operands = 2 : i64, tpu.core_type = #tpu.core_type<tc>} {
    %c0 = arith.constant 0 : index
    %c0_0 = arith.constant 0 : index
    %0 = vector.load %arg0[%c0, %c0_0] : memref<32x16xf32, #tpu.memory_space<vmem>>, vector<32x16xf32>
    %c0_1 = arith.constant 0 : index
    %c0_2 = arith.constant 0 : index
    %1 = vector.load %arg1[%c0_1, %c0_2] : memref<16x256xf32, #tpu.memory_space<vmem>>, vector<16x256xf32>
    %cst = arith.constant dense<0.000000e+00> : vector<32x256xf32>
    %2 = tpu.matmul %0, %1, %cst {dimension_numbers = #tpu.dot_dimension_numbers<[1], [0], [0], [1], [0, 0, 1, 1], [], []>} : vector<32x16xf32>, vector<16x256xf32>, vector<32x256xf32> -> vector<32x256xf32>
    %c0_3 = arith.constant 0 : index
    %c0_4 = arith.constant 0 : index
    %3 = vector.load %arg2[%c0_3, %c0_4] : memref<1x256xf32, #tpu.memory_space<vmem>>, vector<1x256xf32>
    %4 = vector.broadcast %3 : vector<1x256xf32> to vector<32x256xf32>
    %5 = arith.addf %2, %4 : vector<32x256xf32>
    %c0_5 = arith.constant 0 : index
    %c0_6 = arith.constant 0 : index
    %6 = vector.load %arg7[%c0_5, %c0_6] : memref<32x256xf32, #tpu.memory_space<vmem>>, vector<32x256xf32>
    tpu.vector_store %arg7[%c0_5, %c0_6], %5 {strides = array<i32>} : memref<32x256xf32, #tpu.memory_space<vmem>>, vector<32x256xf32>,
    %c0_7 = arith.constant 0 : index
    %c0_8 = arith.constant 0 : index
    %7 = vector.load %arg3[%c0_7, %c0_8] : memref<64x256xbf16, #tpu.memory_space<vmem>>, vector<64x256xbf16>
    %cst_9 = arith.constant 0.000000e+00 : f32
    %8 = vector.broadcast %cst_9 : f32 to vector<2x64xf32>
    %cst_10 = arith.constant 0.000000e+00 : f32
    %9 = vector.broadcast %cst_10 : f32 to vector<2x64xf32>
    %c0_11 = arith.constant 0 : index
    %c0_12 = arith.constant 0 : index
    %10 = vector.load %arg7[%c0_11, %c0_12] : memref<32x256xf32, #tpu.memory_space<vmem>>, vector<2x256xf32>
    %11 = arith.truncf %8 : vector<2x64xf32> to vector<2x64xbf16>
    %cst_13 = arith.constant dense<0.000000e+00> : vector<2x256xf32>
    %12 = tpu.matmul %11, %7, %cst_13 {dimension_numbers = #tpu.dot_dimension_numbers<[1], [0], [0], [1], [0, 0, 1, 1], [], []>} : vector<2x64xbf16>, vector<64x256xbf16>, vector<2x256xf32> -> vector<2x256xf32>
    %13 = arith.addf %10, %12 : vector<2x256xf32>
    %14 = arith.negf %13 : vector<2x256xf32>
    %15 = math.exp %14 : vector<2x256xf32>
    %cst_14 = arith.constant 1.000000e+00 : f32
    %16 = vector.broadcast %cst_14 : f32 to vector<2x256xf32>
    %17 = arith.addf %16, %15 : vector<2x256xf32>
    %18 = arith.divf %16, %17 : vector<2x256xf32>
    %19 = math.tanh %13 : vector<2x256xf32>
    %20 = vector.extract_strided_slice %18 {offsets = [0, 0], sizes = [2, 64], strides = [1, 1]} : vector<2x256xf32> to vector<2x64xf32>
    %21 = vector.extract_strided_slice %18 {offsets = [0, 64], sizes = [2, 64], strides = [1, 1]} : vector<2x256xf32> to vector<2x64xf32>
    %22 = vector.extract_strided_slice %19 {offsets = [0, 128], sizes = [2, 64], strides = [1, 1]} : vector<2x256xf32> to vector<2x64xf32>
    %23 = vector.extract_strided_slice %18 {offsets = [0, 192], sizes = [2, 64], strides = [1, 1]} : vector<2x256xf32> to vector<2x64xf32>
    %24 = arith.mulf %21, %9 : vector<2x64xf32>
    %25 = arith.mulf %20, %22 : vector<2x64xf32>
    %26 = arith.addf %24, %25 : vector<2x64xf32>
    %27 = math.tanh %26 : vector<2x64xf32>
    %28 = arith.mulf %23, %27 : vector<2x64xf32>
    %29 = vector.extract_strided_slice %28 {offsets = [0, 0], sizes = [2, 32], strides = [1, 1]} : vector<2x64xf32> to vector<2x32xf32>
    %c0_15 = arith.constant 0 : index
    %c0_16 = arith.constant 0 : index
    %30 = vector.load %arg8[%c0_15, %c0_16] : memref<32x64xf32, #tpu.memory_space<vmem>>, vector<2x32xf32>
    tpu.vector_store %arg8[%c0_15, %c0_16], %29 {strides = array<i32>} : memref<32x64xf32, #tpu.memory_space<vmem>>, vector<2x32xf32>,
    %31 = vector.extract_strided_slice %28 {offsets = [0, 32], sizes = [2, 32], strides = [1, 1]} : vector<2x64xf32> to vector<2x32xf32>
    %c30 = arith.constant 30 : index
    %c32 = arith.constant 32 : index
    %32 = vector.load %arg8[%c30, %c32] : memref<32x64xf32, #tpu.memory_space<vmem>>, vector<2x32xf32>
    tpu.vector_store %arg8[%c30, %c32], %31 {strides = array<i32>} : memref<32x64xf32, #tpu.memory_space<vmem>>, vector<2x32xf32>,
    %c2 = arith.constant 2 : index
    %c0_17 = arith.constant 0 : index
    %33 = vector.load %arg7[%c2, %c0_17] : memref<32x256xf32, #tpu.memory_space<vmem>>, vector<2x256xf32>
    %34 = arith.truncf %28 : vector<2x64xf32> to vector<2x64xbf16>
    %cst_18 = arith.constant dense<0.000000e+00> : vector<2x256xf32>
    %35 = tpu.matmul %34, %7, %cst_18 {dimension_numbers = #tpu.dot_dimension_numbers<[1], [0], [0], [1], [0, 0, 1, 1], [], []>} : vector<2x64xbf16>, vector<64x256xbf16>, vector<2x256xf32> -> vector<2x256xf32>
    %36 = arith.addf %33, %35 : vector<2x256xf32>
    %37 = arith.negf %36 : vector<2x256xf32>
    %38 = math.exp %37 : vector<2x256xf32>
    %cst_19 = arith.constant 1.000000e+00 : f32
    %39 = vector.broadcast %cst_19 : f32 to vector<2x256xf32>
    %40 = arith.addf %39, %38 : vector<2x256xf32>
    %41 = arith.divf %39, %40 : vector<2x256xf32>
    %42 = math.tanh %36 : vector<2x256xf32>
    %43 = vector.extract_strided_slice %41 {offsets = [0, 0], sizes = [2, 64], strides = [1, 1]} : vector<2x256xf32> to vector<2x64xf32>
    %44 = vector.extract_strided_slice %41 {offsets = [0, 64], sizes = [2, 64], strides = [1, 1]} : vector<2x256xf32> to vector<2x64xf32>
    %45 = vector.extract_strided_slice %42 {offsets = [0, 128], sizes = [2, 64], strides = [1, 1]} : vector<2x256xf32> to vector<2x64xf32>
    %46 = vector.extract_strided_slice %41 {offsets = [0, 192], sizes = [2, 64], strides = [1, 1]} : vector<2x256xf32> to vector<2x64xf32>
    %47 = arith.mulf %44, %26 : vector<2x64xf32>
    %48 = arith.mulf %43, %45 : vector<2x64xf32>
    %49 = arith.addf %47, %48 : vector<2x64xf32>
    %50 = math.tanh %49 : vector<2x64xf32>
    %51 = arith.mulf %46, %50 : vector<2x64xf32>
    %52 = vector.extract_strided_slice %51 {offsets = [0, 0], sizes = [2, 32], strides = [1, 1]} : vector<2x64xf32> to vector<2x32xf32>
    %c2_20 = arith.constant 2 : index
    %c0_21 = arith.constant 0 : index
    %53 = vector.load %arg8[%c2_20, %c0_21] : memref<32x64xf32, #tpu.memory_space<vmem>>, vector<2x32xf32>
    tpu.vector_store %arg8[%c2_20, %c0_21], %52 {strides = array<i32>} : memref<32x64xf32, #tpu.memory_space<vmem>>, vector<2x32xf32>,
    %54 = vector.extract_strided_slice %51 {offsets = [0, 32], sizes = [2, 32], strides = [1, 1]} : vector<2x64xf32> to vector<2x32xf32>
    %c28 = arith.constant 28 : index
    %c32_22 = arith.constant 32 : index
    %55 = vector.load %arg8[%c28, %c32_22] : memref<32x64xf32, #tpu.memory_space<vmem>>, vector<2x32xf32>
    tpu.vector_store %arg8[%c28, %c32_22], %54 {strides = array<i32>} : memref<32x64xf32, #tpu.memory_space<vmem>>, vector<2x32xf32>,
    %c4 = arith.constant 4 : index
    %c0_23 = arith.constant 0 : index
    %56 = vector.load %arg7[%c4, %c0_23] : memref<32x256xf32, #tpu.memory_space<vmem>>, vector<2x256xf32>
    %57 = arith.truncf %51 : vector<2x64xf32> to vector<2x64xbf16>
    %cst_24 = arith.constant dense<0.000000e+00> : vector<2x256xf32>
    %58 = tpu.matmul %57, %7, %cst_24 {dimension_numbers = #tpu.dot_dimension_numbers<[1], [0], [0], [1], [0, 0, 1, 1], [], []>} : vector<2x64xbf16>, vector<64x256xbf16>, vector<2x256xf32> -> vector<2x256xf32>
    %59 = arith.addf %56, %58 : vector<2x256xf32>
    %60 = arith.negf %59 : vector<2x256xf32>
    %61 = math.exp %60 : vector<2x256xf32>
    %cst_25 = arith.constant 1.000000e+00 : f32
    %62 = vector.broadcast %cst_25 : f32 to vector<2x256xf32>
    %63 = arith.addf %62, %61 : vector<2x256xf32>
    %64 = arith.divf %62, %63 : vector<2x256xf32>
    %65 = math.tanh %59 : vector<2x256xf32>
    %66 = vector.extract_strided_slice %64 {offsets = [0, 0], sizes = [2, 64], strides = [1, 1]} : vector<2x256xf32> to vector<2x64xf32>
    %67 = vector.extract_strided_slice %64 {offsets = [0, 64], sizes = [2, 64], strides = [1, 1]} : vector<2x256xf32> to vector<2x64xf32>
    %68 = vector.extract_strided_slice %65 {offsets = [0, 128], sizes = [2, 64], strides = [1, 1]} : vector<2x256xf32> to vector<2x64xf32>
    %69 = vector.extract_strided_slice %64 {offsets = [0, 192], sizes = [2, 64], strides = [1, 1]} : vector<2x256xf32> to vector<2x64xf32>
    %70 = arith.mulf %67, %49 : vector<2x64xf32>
    %71 = arith.mulf %66, %68 : vector<2x64xf32>
    %72 = arith.addf %70, %71 : vector<2x64xf32>
    %73 = math.tanh %72 : vector<2x64xf32>
    %74 = arith.mulf %69, %73 : vector<2x64xf32>
    %75 = vector.extract_strided_slice %74 {offsets = [0, 0], sizes = [2, 32], strides = [1, 1]} : vector<2x64xf32> to vector<2x32xf32>
    %c4_26 = arith.constant 4 : index
    %c0_27 = arith.constant 0 : index
    %76 = vector.load %arg8[%c4_26, %c0_27] : memref<32x64xf32, #tpu.memory_space<vmem>>, vector<2x32xf32>
    tpu.vector_store %arg8[%c4_26, %c0_27], %75 {strides = array<i32>} : memref<32x64xf32, #tpu.memory_space<vmem>>, vector<2x32xf32>,
    %77 = vector.extract_strided_slice %74 {offsets = [0, 32], sizes = [2, 32], strides = [1, 1]} : vector<2x64xf32> to vector<2x32xf32>
    %c26 = arith.constant 26 : index
    %c32_28 = arith.constant 32 : index
    %78 = vector.load %arg8[%c26, %c32_28] : memref<32x64xf32, #tpu.memory_space<vmem>>, vector<2x32xf32>
    tpu.vector_store %arg8[%c26, %c32_28], %77 {strides = array<i32>} : memref<32x64xf32, #tpu.memory_space<vmem>>, vector<2x32xf32>,
    %c6 = arith.constant 6 : index
    %c0_29 = arith.constant 0 : index
    %79 = vector.load %arg7[%c6, %c0_29] : memref<32x256xf32, #tpu.memory_space<vmem>>, vector<2x256xf32>
    %80 = arith.truncf %74 : vector<2x64xf32> to vector<2x64xbf16>
    %cst_30 = arith.constant dense<0.000000e+00> : vector<2x256xf32>
    %81 = tpu.matmul %80, %7, %cst_30 {dimension_numbers = #tpu.dot_dimension_numbers<[1], [0], [0], [1], [0, 0, 1, 1], [], []>} : vector<2x64xbf16>, vector<64x256xbf16>, vector<2x256xf32> -> vector<2x256xf32>
    %82 = arith.addf %79, %81 : vector<2x256xf32>
    %83 = arith.negf %82 : vector<2x256xf32>
    %84 = math.exp %83 : vector<2x256xf32>
    %cst_31 = arith.constant 1.000000e+00 : f32
    %85 = vector.broadcast %cst_31 : f32 to vector<2x256xf32>
    %86 = arith.addf %85, %84 : vector<2x256xf32>
    %87 = arith.divf %85, %86 : vector<2x256xf32>
    %88 = math.tanh %82 : vector<2x256xf32>
    %89 = vector.extract_strided_slice %87 {offsets = [0, 0], sizes = [2, 64], strides = [1, 1]} : vector<2x256xf32> to vector<2x64xf32>
    %90 = vector.extract_strided_slice %87 {offsets = [0, 64], sizes = [2, 64], strides = [1, 1]} : vector<2x256xf32> to vector<2x64xf32>
    %91 = vector.extract_strided_slice %88 {offsets = [0, 128], sizes = [2, 64], strides = [1, 1]} : vector<2x256xf32> to vector<2x64xf32>
    %92 = vector.extract_strided_slice %87 {offsets = [0, 192], sizes = [2, 64], strides = [1, 1]} : vector<2x256xf32> to vector<2x64xf32>
    %93 = arith.mulf %90, %72 : vector<2x64xf32>
    %94 = arith.mulf %89, %91 : vector<2x64xf32>
    %95 = arith.addf %93, %94 : vector<2x64xf32>
    %96 = math.tanh %95 : vector<2x64xf32>
    %97 = arith.mulf %92, %96 : vector<2x64xf32>
    %98 = vector.extract_strided_slice %97 {offsets = [0, 0], sizes = [2, 32], strides = [1, 1]} : vector<2x64xf32> to vector<2x32xf32>
    %c6_32 = arith.constant 6 : index
    %c0_33 = arith.constant 0 : index
    %99 = vector.load %arg8[%c6_32, %c0_33] : memref<32x64xf32, #tpu.memory_space<vmem>>, vector<2x32xf32>
    tpu.vector_store %arg8[%c6_32, %c0_33], %98 {strides = array<i32>} : memref<32x64xf32, #tpu.memory_space<vmem>>, vector<2x32xf32>,
    %100 = vector.extract_strided_slice %97 {offsets = [0, 32], sizes = [2, 32], strides = [1, 1]} : vector<2x64xf32> to vector<2x32xf32>
    %c24 = arith.constant 24 : index
    %c32_34 = arith.constant 32 : index
    %101 = vector.load %arg8[%c24, %c32_34] : memref<32x64xf32, #tpu.memory_space<vmem>>, vector<2x32xf32>
    tpu.vector_store %arg8[%c24, %c32_34], %100 {strides = array<i32>} : memref<32x64xf32, #tpu.memory_space<vmem>>, vector<2x32xf32>,
    %c8 = arith.constant 8 : index
    %c0_35 = arith.constant 0 : index
    %102 = vector.load %arg7[%c8, %c0_35] : memref<32x256xf32, #tpu.memory_space<vmem>>, vector<2x256xf32>
    %103 = arith.truncf %97 : vector<2x64xf32> to vector<2x64xbf16>
    %cst_36 = arith.constant dense<0.000000e+00> : vector<2x256xf32>
    %104 = tpu.matmul %103, %7, %cst_36 {dimension_numbers = #tpu.dot_dimension_numbers<[1], [0], [0], [1], [0, 0, 1, 1], [], []>} : vector<2x64xbf16>, vector<64x256xbf16>, vector<2x256xf32> -> vector<2x256xf32>
    %105 = arith.addf %102, %104 : vector<2x256xf32>
    %106 = arith.negf %105 : vector<2x256xf32>
    %107 = math.exp %106 : vector<2x256xf32>
    %cst_37 = arith.constant 1.000000e+00 : f32
    %108 = vector.broadcast %cst_37 : f32 to vector<2x256xf32>
    %109 = arith.addf %108, %107 : vector<2x256xf32>
    %110 = arith.divf %108, %109 : vector<2x256xf32>
    %111 = math.tanh %105 : vector<2x256xf32>
    %112 = vector.extract_strided_slice %110 {offsets = [0, 0], sizes = [2, 64], strides = [1, 1]} : vector<2x256xf32> to vector<2x64xf32>
    %113 = vector.extract_strided_slice %110 {offsets = [0, 64], sizes = [2, 64], strides = [1, 1]} : vector<2x256xf32> to vector<2x64xf32>
    %114 = vector.extract_strided_slice %111 {offsets = [0, 128], sizes = [2, 64], strides = [1, 1]} : vector<2x256xf32> to vector<2x64xf32>
    %115 = vector.extract_strided_slice %110 {offsets = [0, 192], sizes = [2, 64], strides = [1, 1]} : vector<2x256xf32> to vector<2x64xf32>
    %116 = arith.mulf %113, %95 : vector<2x64xf32>
    %117 = arith.mulf %112, %114 : vector<2x64xf32>
    %118 = arith.addf %116, %117 : vector<2x64xf32>
    %119 = math.tanh %118 : vector<2x64xf32>
    %120 = arith.mulf %115, %119 : vector<2x64xf32>
    %121 = vector.extract_strided_slice %120 {offsets = [0, 0], sizes = [2, 32], strides = [1, 1]} : vector<2x64xf32> to vector<2x32xf32>
    %c8_38 = arith.constant 8 : index
    %c0_39 = arith.constant 0 : index
    %122 = vector.load %arg8[%c8_38, %c0_39] : memref<32x64xf32, #tpu.memory_space<vmem>>, vector<2x32xf32>
    tpu.vector_store %arg8[%c8_38, %c0_39], %121 {strides = array<i32>} : memref<32x64xf32, #tpu.memory_space<vmem>>, vector<2x32xf32>,
    %123 = vector.extract_strided_slice %120 {offsets = [0, 32], sizes = [2, 32], strides = [1, 1]} : vector<2x64xf32> to vector<2x32xf32>
    %c22 = arith.constant 22 : index
    %c32_40 = arith.constant 32 : index
    %124 = vector.load %arg8[%c22, %c32_40] : memref<32x64xf32, #tpu.memory_space<vmem>>, vector<2x32xf32>
    tpu.vector_store %arg8[%c22, %c32_40], %123 {strides = array<i32>} : memref<32x64xf32, #tpu.memory_space<vmem>>, vector<2x32xf32>,
    %c10 = arith.constant 10 : index
    %c0_41 = arith.constant 0 : index
    %125 = vector.load %arg7[%c10, %c0_41] : memref<32x256xf32, #tpu.memory_space<vmem>>, vector<2x256xf32>
    %126 = arith.truncf %120 : vector<2x64xf32> to vector<2x64xbf16>
    %cst_42 = arith.constant dense<0.000000e+00> : vector<2x256xf32>
    %127 = tpu.matmul %126, %7, %cst_42 {dimension_numbers = #tpu.dot_dimension_numbers<[1], [0], [0], [1], [0, 0, 1, 1], [], []>} : vector<2x64xbf16>, vector<64x256xbf16>, vector<2x256xf32> -> vector<2x256xf32>
    %128 = arith.addf %125, %127 : vector<2x256xf32>
    %129 = arith.negf %128 : vector<2x256xf32>
    %130 = math.exp %129 : vector<2x256xf32>
    %cst_43 = arith.constant 1.000000e+00 : f32
    %131 = vector.broadcast %cst_43 : f32 to vector<2x256xf32>
    %132 = arith.addf %131, %130 : vector<2x256xf32>
    %133 = arith.divf %131, %132 : vector<2x256xf32>
    %134 = math.tanh %128 : vector<2x256xf32>
    %135 = vector.extract_strided_slice %133 {offsets = [0, 0], sizes = [2, 64], strides = [1, 1]} : vector<2x256xf32> to vector<2x64xf32>
    %136 = vector.extract_strided_slice %133 {offsets = [0, 64], sizes = [2, 64], strides = [1, 1]} : vector<2x256xf32> to vector<2x64xf32>
    %137 = vector.extract_strided_slice %134 {offsets = [0, 128], sizes = [2, 64], strides = [1, 1]} : vector<2x256xf32> to vector<2x64xf32>
    %138 = vector.extract_strided_slice %133 {offsets = [0, 192], sizes = [2, 64], strides = [1, 1]} : vector<2x256xf32> to vector<2x64xf32>
    %139 = arith.mulf %136, %118 : vector<2x64xf32>
    %140 = arith.mulf %135, %137 : vector<2x64xf32>
    %141 = arith.addf %139, %140 : vector<2x64xf32>
    %142 = math.tanh %141 : vector<2x64xf32>
    %143 = arith.mulf %138, %142 : vector<2x64xf32>
    %144 = vector.extract_strided_slice %143 {offsets = [0, 0], sizes = [2, 32], strides = [1, 1]} : vector<2x64xf32> to vector<2x32xf32>
    %c10_44 = arith.constant 10 : index
    %c0_45 = arith.constant 0 : index
    %145 = vector.load %arg8[%c10_44, %c0_45] : memref<32x64xf32, #tpu.memory_space<vmem>>, vector<2x32xf32>
    tpu.vector_store %arg8[%c10_44, %c0_45], %144 {strides = array<i32>} : memref<32x64xf32, #tpu.memory_space<vmem>>, vector<2x32xf32>,
    %146 = vector.extract_strided_slice %143 {offsets = [0, 32], sizes = [2, 32], strides = [1, 1]} : vector<2x64xf32> to vector<2x32xf32>
    %c20 = arith.constant 20 : index
    %c32_46 = arith.constant 32 : index
    %147 = vector.load %arg8[%c20, %c32_46] : memref<32x64xf32, #tpu.memory_space<vmem>>, vector<2x32xf32>
    tpu.vector_store %arg8[%c20, %c32_46], %146 {strides = array<i32>} : memref<32x64xf32, #tpu.memory_space<vmem>>, vector<2x32xf32>,
    %c12 = arith.constant 12 : index
    %c0_47 = arith.constant 0 : index
    %148 = vector.load %arg7[%c12, %c0_47] : memref<32x256xf32, #tpu.memory_space<vmem>>, vector<2x256xf32>
    %149 = arith.truncf %143 : vector<2x64xf32> to vector<2x64xbf16>
    %cst_48 = arith.constant dense<0.000000e+00> : vector<2x256xf32>
    %150 = tpu.matmul %149, %7, %cst_48 {dimension_numbers = #tpu.dot_dimension_numbers<[1], [0], [0], [1], [0, 0, 1, 1], [], []>} : vector<2x64xbf16>, vector<64x256xbf16>, vector<2x256xf32> -> vector<2x256xf32>
    %151 = arith.addf %148, %150 : vector<2x256xf32>
    %152 = arith.negf %151 : vector<2x256xf32>
    %153 = math.exp %152 : vector<2x256xf32>
    %cst_49 = arith.constant 1.000000e+00 : f32
    %154 = vector.broadcast %cst_49 : f32 to vector<2x256xf32>
    %155 = arith.addf %154, %153 : vector<2x256xf32>
    %156 = arith.divf %154, %155 : vector<2x256xf32>
    %157 = math.tanh %151 : vector<2x256xf32>
    %158 = vector.extract_strided_slice %156 {offsets = [0, 0], sizes = [2, 64], strides = [1, 1]} : vector<2x256xf32> to vector<2x64xf32>
    %159 = vector.extract_strided_slice %156 {offsets = [0, 64], sizes = [2, 64], strides = [1, 1]} : vector<2x256xf32> to vector<2x64xf32>
    %160 = vector.extract_strided_slice %157 {offsets = [0, 128], sizes = [2, 64], strides = [1, 1]} : vector<2x256xf32> to vector<2x64xf32>
    %161 = vector.extract_strided_slice %156 {offsets = [0, 192], sizes = [2, 64], strides = [1, 1]} : vector<2x256xf32> to vector<2x64xf32>
    %162 = arith.mulf %159, %141 : vector<2x64xf32>
    %163 = arith.mulf %158, %160 : vector<2x64xf32>
    %164 = arith.addf %162, %163 : vector<2x64xf32>
    %165 = math.tanh %164 : vector<2x64xf32>
    %166 = arith.mulf %161, %165 : vector<2x64xf32>
    %167 = vector.extract_strided_slice %166 {offsets = [0, 0], sizes = [2, 32], strides = [1, 1]} : vector<2x64xf32> to vector<2x32xf32>
    %c12_50 = arith.constant 12 : index
    %c0_51 = arith.constant 0 : index
    %168 = vector.load %arg8[%c12_50, %c0_51] : memref<32x64xf32, #tpu.memory_space<vmem>>, vector<2x32xf32>
    tpu.vector_store %arg8[%c12_50, %c0_51], %167 {strides = array<i32>} : memref<32x64xf32, #tpu.memory_space<vmem>>, vector<2x32xf32>,
    %169 = vector.extract_strided_slice %166 {offsets = [0, 32], sizes = [2, 32], strides = [1, 1]} : vector<2x64xf32> to vector<2x32xf32>
    %c18 = arith.constant 18 : index
    %c32_52 = arith.constant 32 : index
    %170 = vector.load %arg8[%c18, %c32_52] : memref<32x64xf32, #tpu.memory_space<vmem>>, vector<2x32xf32>
    tpu.vector_store %arg8[%c18, %c32_52], %169 {strides = array<i32>} : memref<32x64xf32, #tpu.memory_space<vmem>>, vector<2x32xf32>,
    %c14 = arith.constant 14 : index
    %c0_53 = arith.constant 0 : index
    %171 = vector.load %arg7[%c14, %c0_53] : memref<32x256xf32, #tpu.memory_space<vmem>>, vector<2x256xf32>
    %172 = arith.truncf %166 : vector<2x64xf32> to vector<2x64xbf16>
    %cst_54 = arith.constant dense<0.000000e+00> : vector<2x256xf32>
    %173 = tpu.matmul %172, %7, %cst_54 {dimension_numbers = #tpu.dot_dimension_numbers<[1], [0], [0], [1], [0, 0, 1, 1], [], []>} : vector<2x64xbf16>, vector<64x256xbf16>, vector<2x256xf32> -> vector<2x256xf32>
    %174 = arith.addf %171, %173 : vector<2x256xf32>
    %175 = arith.negf %174 : vector<2x256xf32>
    %176 = math.exp %175 : vector<2x256xf32>
    %cst_55 = arith.constant 1.000000e+00 : f32
    %177 = vector.broadcast %cst_55 : f32 to vector<2x256xf32>
    %178 = arith.addf %177, %176 : vector<2x256xf32>
    %179 = arith.divf %177, %178 : vector<2x256xf32>
    %180 = math.tanh %174 : vector<2x256xf32>
    %181 = vector.extract_strided_slice %179 {offsets = [0, 0], sizes = [2, 64], strides = [1, 1]} : vector<2x256xf32> to vector<2x64xf32>
    %182 = vector.extract_strided_slice %179 {offsets = [0, 64], sizes = [2, 64], strides = [1, 1]} : vector<2x256xf32> to vector<2x64xf32>
    %183 = vector.extract_strided_slice %180 {offsets = [0, 128], sizes = [2, 64], strides = [1, 1]} : vector<2x256xf32> to vector<2x64xf32>
    %184 = vector.extract_strided_slice %179 {offsets = [0, 192], sizes = [2, 64], strides = [1, 1]} : vector<2x256xf32> to vector<2x64xf32>
    %185 = arith.mulf %182, %164 : vector<2x64xf32>
    %186 = arith.mulf %181, %183 : vector<2x64xf32>
    %187 = arith.addf %185, %186 : vector<2x64xf32>
    %188 = math.tanh %187 : vector<2x64xf32>
    %189 = arith.mulf %184, %188 : vector<2x64xf32>
    %190 = vector.extract_strided_slice %189 {offsets = [0, 0], sizes = [2, 32], strides = [1, 1]} : vector<2x64xf32> to vector<2x32xf32>
    %c14_56 = arith.constant 14 : index
    %c0_57 = arith.constant 0 : index
    %191 = vector.load %arg8[%c14_56, %c0_57] : memref<32x64xf32, #tpu.memory_space<vmem>>, vector<2x32xf32>
    tpu.vector_store %arg8[%c14_56, %c0_57], %190 {strides = array<i32>} : memref<32x64xf32, #tpu.memory_space<vmem>>, vector<2x32xf32>,
    %192 = vector.extract_strided_slice %189 {offsets = [0, 32], sizes = [2, 32], strides = [1, 1]} : vector<2x64xf32> to vector<2x32xf32>
    %c16 = arith.constant 16 : index
    %c32_58 = arith.constant 32 : index
    %193 = vector.load %arg8[%c16, %c32_58] : memref<32x64xf32, #tpu.memory_space<vmem>>, vector<2x32xf32>
    tpu.vector_store %arg8[%c16, %c32_58], %192 {strides = array<i32>} : memref<32x64xf32, #tpu.memory_space<vmem>>, vector<2x32xf32>,
    %c16_59 = arith.constant 16 : index
    %c0_60 = arith.constant 0 : index
    %194 = vector.load %arg7[%c16_59, %c0_60] : memref<32x256xf32, #tpu.memory_space<vmem>>, vector<2x256xf32>
    %195 = arith.truncf %189 : vector<2x64xf32> to vector<2x64xbf16>
    %cst_61 = arith.constant dense<0.000000e+00> : vector<2x256xf32>
    %196 = tpu.matmul %195, %7, %cst_61 {dimension_numbers = #tpu.dot_dimension_numbers<[1], [0], [0], [1], [0, 0, 1, 1], [], []>} : vector<2x64xbf16>, vector<64x256xbf16>, vector<2x256xf32> -> vector<2x256xf32>
    %197 = arith.addf %194, %196 : vector<2x256xf32>
    %198 = arith.negf %197 : vector<2x256xf32>
    %199 = math.exp %198 : vector<2x256xf32>
    %cst_62 = arith.constant 1.000000e+00 : f32
    %200 = vector.broadcast %cst_62 : f32 to vector<2x256xf32>
    %201 = arith.addf %200, %199 : vector<2x256xf32>
    %202 = arith.divf %200, %201 : vector<2x256xf32>
    %203 = math.tanh %197 : vector<2x256xf32>
    %204 = vector.extract_strided_slice %202 {offsets = [0, 0], sizes = [2, 64], strides = [1, 1]} : vector<2x256xf32> to vector<2x64xf32>
    %205 = vector.extract_strided_slice %202 {offsets = [0, 64], sizes = [2, 64], strides = [1, 1]} : vector<2x256xf32> to vector<2x64xf32>
    %206 = vector.extract_strided_slice %203 {offsets = [0, 128], sizes = [2, 64], strides = [1, 1]} : vector<2x256xf32> to vector<2x64xf32>
    %207 = vector.extract_strided_slice %202 {offsets = [0, 192], sizes = [2, 64], strides = [1, 1]} : vector<2x256xf32> to vector<2x64xf32>
    %208 = arith.mulf %205, %187 : vector<2x64xf32>
    %209 = arith.mulf %204, %206 : vector<2x64xf32>
    %210 = arith.addf %208, %209 : vector<2x64xf32>
    %211 = math.tanh %210 : vector<2x64xf32>
    %212 = arith.mulf %207, %211 : vector<2x64xf32>
    %213 = vector.extract_strided_slice %212 {offsets = [0, 0], sizes = [2, 32], strides = [1, 1]} : vector<2x64xf32> to vector<2x32xf32>
    %c16_63 = arith.constant 16 : index
    %c0_64 = arith.constant 0 : index
    %214 = vector.load %arg8[%c16_63, %c0_64] : memref<32x64xf32, #tpu.memory_space<vmem>>, vector<2x32xf32>
    tpu.vector_store %arg8[%c16_63, %c0_64], %213 {strides = array<i32>} : memref<32x64xf32, #tpu.memory_space<vmem>>, vector<2x32xf32>,
    %215 = vector.extract_strided_slice %212 {offsets = [0, 32], sizes = [2, 32], strides = [1, 1]} : vector<2x64xf32> to vector<2x32xf32>
    %c14_65 = arith.constant 14 : index
    %c32_66 = arith.constant 32 : index
    %216 = vector.load %arg8[%c14_65, %c32_66] : memref<32x64xf32, #tpu.memory_space<vmem>>, vector<2x32xf32>
    tpu.vector_store %arg8[%c14_65, %c32_66], %215 {strides = array<i32>} : memref<32x64xf32, #tpu.memory_space<vmem>>, vector<2x32xf32>,
    %c18_67 = arith.constant 18 : index
    %c0_68 = arith.constant 0 : index
    %217 = vector.load %arg7[%c18_67, %c0_68] : memref<32x256xf32, #tpu.memory_space<vmem>>, vector<2x256xf32>
    %218 = arith.truncf %212 : vector<2x64xf32> to vector<2x64xbf16>
    %cst_69 = arith.constant dense<0.000000e+00> : vector<2x256xf32>
    %219 = tpu.matmul %218, %7, %cst_69 {dimension_numbers = #tpu.dot_dimension_numbers<[1], [0], [0], [1], [0, 0, 1, 1], [], []>} : vector<2x64xbf16>, vector<64x256xbf16>, vector<2x256xf32> -> vector<2x256xf32>
    %220 = arith.addf %217, %219 : vector<2x256xf32>
    %221 = arith.negf %220 : vector<2x256xf32>
    %222 = math.exp %221 : vector<2x256xf32>
    %cst_70 = arith.constant 1.000000e+00 : f32
    %223 = vector.broadcast %cst_70 : f32 to vector<2x256xf32>
    %224 = arith.addf %223, %222 : vector<2x256xf32>
    %225 = arith.divf %223, %224 : vector<2x256xf32>
    %226 = math.tanh %220 : vector<2x256xf32>
    %227 = vector.extract_strided_slice %225 {offsets = [0, 0], sizes = [2, 64], strides = [1, 1]} : vector<2x256xf32> to vector<2x64xf32>
    %228 = vector.extract_strided_slice %225 {offsets = [0, 64], sizes = [2, 64], strides = [1, 1]} : vector<2x256xf32> to vector<2x64xf32>
    %229 = vector.extract_strided_slice %226 {offsets = [0, 128], sizes = [2, 64], strides = [1, 1]} : vector<2x256xf32> to vector<2x64xf32>
    %230 = vector.extract_strided_slice %225 {offsets = [0, 192], sizes = [2, 64], strides = [1, 1]} : vector<2x256xf32> to vector<2x64xf32>
    %231 = arith.mulf %228, %210 : vector<2x64xf32>
    %232 = arith.mulf %227, %229 : vector<2x64xf32>
    %233 = arith.addf %231, %232 : vector<2x64xf32>
    %234 = math.tanh %233 : vector<2x64xf32>
    %235 = arith.mulf %230, %234 : vector<2x64xf32>
    %236 = vector.extract_strided_slice %235 {offsets = [0, 0], sizes = [2, 32], strides = [1, 1]} : vector<2x64xf32> to vector<2x32xf32>
    %c18_71 = arith.constant 18 : index
    %c0_72 = arith.constant 0 : index
    %237 = vector.load %arg8[%c18_71, %c0_72] : memref<32x64xf32, #tpu.memory_space<vmem>>, vector<2x32xf32>
    tpu.vector_store %arg8[%c18_71, %c0_72], %236 {strides = array<i32>} : memref<32x64xf32, #tpu.memory_space<vmem>>, vector<2x32xf32>,
    %238 = vector.extract_strided_slice %235 {offsets = [0, 32], sizes = [2, 32], strides = [1, 1]} : vector<2x64xf32> to vector<2x32xf32>
    %c12_73 = arith.constant 12 : index
    %c32_74 = arith.constant 32 : index
    %239 = vector.load %arg8[%c12_73, %c32_74] : memref<32x64xf32, #tpu.memory_space<vmem>>, vector<2x32xf32>
    tpu.vector_store %arg8[%c12_73, %c32_74], %238 {strides = array<i32>} : memref<32x64xf32, #tpu.memory_space<vmem>>, vector<2x32xf32>,
    %c20_75 = arith.constant 20 : index
    %c0_76 = arith.constant 0 : index
    %240 = vector.load %arg7[%c20_75, %c0_76] : memref<32x256xf32, #tpu.memory_space<vmem>>, vector<2x256xf32>
    %241 = arith.truncf %235 : vector<2x64xf32> to vector<2x64xbf16>
    %cst_77 = arith.constant dense<0.000000e+00> : vector<2x256xf32>
    %242 = tpu.matmul %241, %7, %cst_77 {dimension_numbers = #tpu.dot_dimension_numbers<[1], [0], [0], [1], [0, 0, 1, 1], [], []>} : vector<2x64xbf16>, vector<64x256xbf16>, vector<2x256xf32> -> vector<2x256xf32>
    %243 = arith.addf %240, %242 : vector<2x256xf32>
    %244 = arith.negf %243 : vector<2x256xf32>
    %245 = math.exp %244 : vector<2x256xf32>
    %cst_78 = arith.constant 1.000000e+00 : f32
    %246 = vector.broadcast %cst_78 : f32 to vector<2x256xf32>
    %247 = arith.addf %246, %245 : vector<2x256xf32>
    %248 = arith.divf %246, %247 : vector<2x256xf32>
    %249 = math.tanh %243 : vector<2x256xf32>
    %250 = vector.extract_strided_slice %248 {offsets = [0, 0], sizes = [2, 64], strides = [1, 1]} : vector<2x256xf32> to vector<2x64xf32>
    %251 = vector.extract_strided_slice %248 {offsets = [0, 64], sizes = [2, 64], strides = [1, 1]} : vector<2x256xf32> to vector<2x64xf32>
    %252 = vector.extract_strided_slice %249 {offsets = [0, 128], sizes = [2, 64], strides = [1, 1]} : vector<2x256xf32> to vector<2x64xf32>
    %253 = vector.extract_strided_slice %248 {offsets = [0, 192], sizes = [2, 64], strides = [1, 1]} : vector<2x256xf32> to vector<2x64xf32>
    %254 = arith.mulf %251, %233 : vector<2x64xf32>
    %255 = arith.mulf %250, %252 : vector<2x64xf32>
    %256 = arith.addf %254, %255 : vector<2x64xf32>
    %257 = math.tanh %256 : vector<2x64xf32>
    %258 = arith.mulf %253, %257 : vector<2x64xf32>
    %259 = vector.extract_strided_slice %258 {offsets = [0, 0], sizes = [2, 32], strides = [1, 1]} : vector<2x64xf32> to vector<2x32xf32>
    %c20_79 = arith.constant 20 : index
    %c0_80 = arith.constant 0 : index
    %260 = vector.load %arg8[%c20_79, %c0_80] : memref<32x64xf32, #tpu.memory_space<vmem>>, vector<2x32xf32>
    tpu.vector_store %arg8[%c20_79, %c0_80], %259 {strides = array<i32>} : memref<32x64xf32, #tpu.memory_space<vmem>>, vector<2x32xf32>,
    %261 = vector.extract_strided_slice %258 {offsets = [0, 32], sizes = [2, 32], strides = [1, 1]} : vector<2x64xf32> to vector<2x32xf32>
    %c10_81 = arith.constant 10 : index
    %c32_82 = arith.constant 32 : index
    %262 = vector.load %arg8[%c10_81, %c32_82] : memref<32x64xf32, #tpu.memory_space<vmem>>, vector<2x32xf32>
    tpu.vector_store %arg8[%c10_81, %c32_82], %261 {strides = array<i32>} : memref<32x64xf32, #tpu.memory_space<vmem>>, vector<2x32xf32>,
    %c22_83 = arith.constant 22 : index
    %c0_84 = arith.constant 0 : index
    %263 = vector.load %arg7[%c22_83, %c0_84] : memref<32x256xf32, #tpu.memory_space<vmem>>, vector<2x256xf32>
    %264 = arith.truncf %258 : vector<2x64xf32> to vector<2x64xbf16>
    %cst_85 = arith.constant dense<0.000000e+00> : vector<2x256xf32>
    %265 = tpu.matmul %264, %7, %cst_85 {dimension_numbers = #tpu.dot_dimension_numbers<[1], [0], [0], [1], [0, 0, 1, 1], [], []>} : vector<2x64xbf16>, vector<64x256xbf16>, vector<2x256xf32> -> vector<2x256xf32>
    %266 = arith.addf %263, %265 : vector<2x256xf32>
    %267 = arith.negf %266 : vector<2x256xf32>
    %268 = math.exp %267 : vector<2x256xf32>
    %cst_86 = arith.constant 1.000000e+00 : f32
    %269 = vector.broadcast %cst_86 : f32 to vector<2x256xf32>
    %270 = arith.addf %269, %268 : vector<2x256xf32>
    %271 = arith.divf %269, %270 : vector<2x256xf32>
    %272 = math.tanh %266 : vector<2x256xf32>
    %273 = vector.extract_strided_slice %271 {offsets = [0, 0], sizes = [2, 64], strides = [1, 1]} : vector<2x256xf32> to vector<2x64xf32>
    %274 = vector.extract_strided_slice %271 {offsets = [0, 64], sizes = [2, 64], strides = [1, 1]} : vector<2x256xf32> to vector<2x64xf32>
    %275 = vector.extract_strided_slice %272 {offsets = [0, 128], sizes = [2, 64], strides = [1, 1]} : vector<2x256xf32> to vector<2x64xf32>
    %276 = vector.extract_strided_slice %271 {offsets = [0, 192], sizes = [2, 64], strides = [1, 1]} : vector<2x256xf32> to vector<2x64xf32>
    %277 = arith.mulf %274, %256 : vector<2x64xf32>
    %278 = arith.mulf %273, %275 : vector<2x64xf32>
    %279 = arith.addf %277, %278 : vector<2x64xf32>
    %280 = math.tanh %279 : vector<2x64xf32>
    %281 = arith.mulf %276, %280 : vector<2x64xf32>
    %282 = vector.extract_strided_slice %281 {offsets = [0, 0], sizes = [2, 32], strides = [1, 1]} : vector<2x64xf32> to vector<2x32xf32>
    %c22_87 = arith.constant 22 : index
    %c0_88 = arith.constant 0 : index
    %283 = vector.load %arg8[%c22_87, %c0_88] : memref<32x64xf32, #tpu.memory_space<vmem>>, vector<2x32xf32>
    tpu.vector_store %arg8[%c22_87, %c0_88], %282 {strides = array<i32>} : memref<32x64xf32, #tpu.memory_space<vmem>>, vector<2x32xf32>,
    %284 = vector.extract_strided_slice %281 {offsets = [0, 32], sizes = [2, 32], strides = [1, 1]} : vector<2x64xf32> to vector<2x32xf32>
    %c8_89 = arith.constant 8 : index
    %c32_90 = arith.constant 32 : index
    %285 = vector.load %arg8[%c8_89, %c32_90] : memref<32x64xf32, #tpu.memory_space<vmem>>, vector<2x32xf32>
    tpu.vector_store %arg8[%c8_89, %c32_90], %284 {strides = array<i32>} : memref<32x64xf32, #tpu.memory_space<vmem>>, vector<2x32xf32>,
    %c24_91 = arith.constant 24 : index
    %c0_92 = arith.constant 0 : index
    %286 = vector.load %arg7[%c24_91, %c0_92] : memref<32x256xf32, #tpu.memory_space<vmem>>, vector<2x256xf32>
    %287 = arith.truncf %281 : vector<2x64xf32> to vector<2x64xbf16>
    %cst_93 = arith.constant dense<0.000000e+00> : vector<2x256xf32>
    %288 = tpu.matmul %287, %7, %cst_93 {dimension_numbers = #tpu.dot_dimension_numbers<[1], [0], [0], [1], [0, 0, 1, 1], [], []>} : vector<2x64xbf16>, vector<64x256xbf16>, vector<2x256xf32> -> vector<2x256xf32>
    %289 = arith.addf %286, %288 : vector<2x256xf32>
    %290 = arith.negf %289 : vector<2x256xf32>
    %291 = math.exp %290 : vector<2x256xf32>
    %cst_94 = arith.constant 1.000000e+00 : f32
    %292 = vector.broadcast %cst_94 : f32 to vector<2x256xf32>
    %293 = arith.addf %292, %291 : vector<2x256xf32>
    %294 = arith.divf %292, %293 : vector<2x256xf32>
    %295 = math.tanh %289 : vector<2x256xf32>
    %296 = vector.extract_strided_slice %294 {offsets = [0, 0], sizes = [2, 64], strides = [1, 1]} : vector<2x256xf32> to vector<2x64xf32>
    %297 = vector.extract_strided_slice %294 {offsets = [0, 64], sizes = [2, 64], strides = [1, 1]} : vector<2x256xf32> to vector<2x64xf32>
    %298 = vector.extract_strided_slice %295 {offsets = [0, 128], sizes = [2, 64], strides = [1, 1]} : vector<2x256xf32> to vector<2x64xf32>
    %299 = vector.extract_strided_slice %294 {offsets = [0, 192], sizes = [2, 64], strides = [1, 1]} : vector<2x256xf32> to vector<2x64xf32>
    %300 = arith.mulf %297, %279 : vector<2x64xf32>
    %301 = arith.mulf %296, %298 : vector<2x64xf32>
    %302 = arith.addf %300, %301 : vector<2x64xf32>
    %303 = math.tanh %302 : vector<2x64xf32>
    %304 = arith.mulf %299, %303 : vector<2x64xf32>
    %305 = vector.extract_strided_slice %304 {offsets = [0, 0], sizes = [2, 32], strides = [1, 1]} : vector<2x64xf32> to vector<2x32xf32>
    %c24_95 = arith.constant 24 : index
    %c0_96 = arith.constant 0 : index
    %306 = vector.load %arg8[%c24_95, %c0_96] : memref<32x64xf32, #tpu.memory_space<vmem>>, vector<2x32xf32>
    tpu.vector_store %arg8[%c24_95, %c0_96], %305 {strides = array<i32>} : memref<32x64xf32, #tpu.memory_space<vmem>>, vector<2x32xf32>,
    %307 = vector.extract_strided_slice %304 {offsets = [0, 32], sizes = [2, 32], strides = [1, 1]} : vector<2x64xf32> to vector<2x32xf32>
    %c6_97 = arith.constant 6 : index
    %c32_98 = arith.constant 32 : index
    %308 = vector.load %arg8[%c6_97, %c32_98] : memref<32x64xf32, #tpu.memory_space<vmem>>, vector<2x32xf32>
    tpu.vector_store %arg8[%c6_97, %c32_98], %307 {strides = array<i32>} : memref<32x64xf32, #tpu.memory_space<vmem>>, vector<2x32xf32>,
    %c26_99 = arith.constant 26 : index
    %c0_100 = arith.constant 0 : index
    %309 = vector.load %arg7[%c26_99, %c0_100] : memref<32x256xf32, #tpu.memory_space<vmem>>, vector<2x256xf32>
    %310 = arith.truncf %304 : vector<2x64xf32> to vector<2x64xbf16>
    %cst_101 = arith.constant dense<0.000000e+00> : vector<2x256xf32>
    %311 = tpu.matmul %310, %7, %cst_101 {dimension_numbers = #tpu.dot_dimension_numbers<[1], [0], [0], [1], [0, 0, 1, 1], [], []>} : vector<2x64xbf16>, vector<64x256xbf16>, vector<2x256xf32> -> vector<2x256xf32>
    %312 = arith.addf %309, %311 : vector<2x256xf32>
    %313 = arith.negf %312 : vector<2x256xf32>
    %314 = math.exp %313 : vector<2x256xf32>
    %cst_102 = arith.constant 1.000000e+00 : f32
    %315 = vector.broadcast %cst_102 : f32 to vector<2x256xf32>
    %316 = arith.addf %315, %314 : vector<2x256xf32>
    %317 = arith.divf %315, %316 : vector<2x256xf32>
    %318 = math.tanh %312 : vector<2x256xf32>
    %319 = vector.extract_strided_slice %317 {offsets = [0, 0], sizes = [2, 64], strides = [1, 1]} : vector<2x256xf32> to vector<2x64xf32>
    %320 = vector.extract_strided_slice %317 {offsets = [0, 64], sizes = [2, 64], strides = [1, 1]} : vector<2x256xf32> to vector<2x64xf32>
    %321 = vector.extract_strided_slice %318 {offsets = [0, 128], sizes = [2, 64], strides = [1, 1]} : vector<2x256xf32> to vector<2x64xf32>
    %322 = vector.extract_strided_slice %317 {offsets = [0, 192], sizes = [2, 64], strides = [1, 1]} : vector<2x256xf32> to vector<2x64xf32>
    %323 = arith.mulf %320, %302 : vector<2x64xf32>
    %324 = arith.mulf %319, %321 : vector<2x64xf32>
    %325 = arith.addf %323, %324 : vector<2x64xf32>
    %326 = math.tanh %325 : vector<2x64xf32>
    %327 = arith.mulf %322, %326 : vector<2x64xf32>
    %328 = vector.extract_strided_slice %327 {offsets = [0, 0], sizes = [2, 32], strides = [1, 1]} : vector<2x64xf32> to vector<2x32xf32>
    %c26_103 = arith.constant 26 : index
    %c0_104 = arith.constant 0 : index
    %329 = vector.load %arg8[%c26_103, %c0_104] : memref<32x64xf32, #tpu.memory_space<vmem>>, vector<2x32xf32>
    tpu.vector_store %arg8[%c26_103, %c0_104], %328 {strides = array<i32>} : memref<32x64xf32, #tpu.memory_space<vmem>>, vector<2x32xf32>,
    %330 = vector.extract_strided_slice %327 {offsets = [0, 32], sizes = [2, 32], strides = [1, 1]} : vector<2x64xf32> to vector<2x32xf32>
    %c4_105 = arith.constant 4 : index
    %c32_106 = arith.constant 32 : index
    %331 = vector.load %arg8[%c4_105, %c32_106] : memref<32x64xf32, #tpu.memory_space<vmem>>, vector<2x32xf32>
    tpu.vector_store %arg8[%c4_105, %c32_106], %330 {strides = array<i32>} : memref<32x64xf32, #tpu.memory_space<vmem>>, vector<2x32xf32>,
    %c28_107 = arith.constant 28 : index
    %c0_108 = arith.constant 0 : index
    %332 = vector.load %arg7[%c28_107, %c0_108] : memref<32x256xf32, #tpu.memory_space<vmem>>, vector<2x256xf32>
    %333 = arith.truncf %327 : vector<2x64xf32> to vector<2x64xbf16>
    %cst_109 = arith.constant dense<0.000000e+00> : vector<2x256xf32>
    %334 = tpu.matmul %333, %7, %cst_109 {dimension_numbers = #tpu.dot_dimension_numbers<[1], [0], [0], [1], [0, 0, 1, 1], [], []>} : vector<2x64xbf16>, vector<64x256xbf16>, vector<2x256xf32> -> vector<2x256xf32>
    %335 = arith.addf %332, %334 : vector<2x256xf32>
    %336 = arith.negf %335 : vector<2x256xf32>
    %337 = math.exp %336 : vector<2x256xf32>
    %cst_110 = arith.constant 1.000000e+00 : f32
    %338 = vector.broadcast %cst_110 : f32 to vector<2x256xf32>
    %339 = arith.addf %338, %337 : vector<2x256xf32>
    %340 = arith.divf %338, %339 : vector<2x256xf32>
    %341 = math.tanh %335 : vector<2x256xf32>
    %342 = vector.extract_strided_slice %340 {offsets = [0, 0], sizes = [2, 64], strides = [1, 1]} : vector<2x256xf32> to vector<2x64xf32>
    %343 = vector.extract_strided_slice %340 {offsets = [0, 64], sizes = [2, 64], strides = [1, 1]} : vector<2x256xf32> to vector<2x64xf32>
    %344 = vector.extract_strided_slice %341 {offsets = [0, 128], sizes = [2, 64], strides = [1, 1]} : vector<2x256xf32> to vector<2x64xf32>
    %345 = vector.extract_strided_slice %340 {offsets = [0, 192], sizes = [2, 64], strides = [1, 1]} : vector<2x256xf32> to vector<2x64xf32>
    %346 = arith.mulf %343, %325 : vector<2x64xf32>
    %347 = arith.mulf %342, %344 : vector<2x64xf32>
    %348 = arith.addf %346, %347 : vector<2x64xf32>
    %349 = math.tanh %348 : vector<2x64xf32>
    %350 = arith.mulf %345, %349 : vector<2x64xf32>
    %351 = vector.extract_strided_slice %350 {offsets = [0, 0], sizes = [2, 32], strides = [1, 1]} : vector<2x64xf32> to vector<2x32xf32>
    %c28_111 = arith.constant 28 : index
    %c0_112 = arith.constant 0 : index
    %352 = vector.load %arg8[%c28_111, %c0_112] : memref<32x64xf32, #tpu.memory_space<vmem>>, vector<2x32xf32>
    tpu.vector_store %arg8[%c28_111, %c0_112], %351 {strides = array<i32>} : memref<32x64xf32, #tpu.memory_space<vmem>>, vector<2x32xf32>,
    %353 = vector.extract_strided_slice %350 {offsets = [0, 32], sizes = [2, 32], strides = [1, 1]} : vector<2x64xf32> to vector<2x32xf32>
    %c2_113 = arith.constant 2 : index
    %c32_114 = arith.constant 32 : index
    %354 = vector.load %arg8[%c2_113, %c32_114] : memref<32x64xf32, #tpu.memory_space<vmem>>, vector<2x32xf32>
    tpu.vector_store %arg8[%c2_113, %c32_114], %353 {strides = array<i32>} : memref<32x64xf32, #tpu.memory_space<vmem>>, vector<2x32xf32>,
    %c30_115 = arith.constant 30 : index
    %c0_116 = arith.constant 0 : index
    %355 = vector.load %arg7[%c30_115, %c0_116] : memref<32x256xf32, #tpu.memory_space<vmem>>, vector<2x256xf32>
    %356 = arith.truncf %350 : vector<2x64xf32> to vector<2x64xbf16>
    %cst_117 = arith.constant dense<0.000000e+00> : vector<2x256xf32>
    %357 = tpu.matmul %356, %7, %cst_117 {dimension_numbers = #tpu.dot_dimension_numbers<[1], [0], [0], [1], [0, 0, 1, 1], [], []>} : vector<2x64xbf16>, vector<64x256xbf16>, vector<2x256xf32> -> vector<2x256xf32>
    %358 = arith.addf %355, %357 : vector<2x256xf32>
    %359 = arith.negf %358 : vector<2x256xf32>
    %360 = math.exp %359 : vector<2x256xf32>
    %cst_118 = arith.constant 1.000000e+00 : f32
    %361 = vector.broadcast %cst_118 : f32 to vector<2x256xf32>
    %362 = arith.addf %361, %360 : vector<2x256xf32>
    %363 = arith.divf %361, %362 : vector<2x256xf32>
    %364 = math.tanh %358 : vector<2x256xf32>
    %365 = vector.extract_strided_slice %363 {offsets = [0, 0], sizes = [2, 64], strides = [1, 1]} : vector<2x256xf32> to vector<2x64xf32>
    %366 = vector.extract_strided_slice %363 {offsets = [0, 64], sizes = [2, 64], strides = [1, 1]} : vector<2x256xf32> to vector<2x64xf32>
    %367 = vector.extract_strided_slice %364 {offsets = [0, 128], sizes = [2, 64], strides = [1, 1]} : vector<2x256xf32> to vector<2x64xf32>
    %368 = vector.extract_strided_slice %363 {offsets = [0, 192], sizes = [2, 64], strides = [1, 1]} : vector<2x256xf32> to vector<2x64xf32>
    %369 = arith.mulf %366, %348 : vector<2x64xf32>
    %370 = arith.mulf %365, %367 : vector<2x64xf32>
    %371 = arith.addf %369, %370 : vector<2x64xf32>
    %372 = math.tanh %371 : vector<2x64xf32>
    %373 = arith.mulf %368, %372 : vector<2x64xf32>
    %374 = vector.extract_strided_slice %373 {offsets = [0, 0], sizes = [2, 32], strides = [1, 1]} : vector<2x64xf32> to vector<2x32xf32>
    %c30_119 = arith.constant 30 : index
    %c0_120 = arith.constant 0 : index
    %375 = vector.load %arg8[%c30_119, %c0_120] : memref<32x64xf32, #tpu.memory_space<vmem>>, vector<2x32xf32>
    tpu.vector_store %arg8[%c30_119, %c0_120], %374 {strides = array<i32>} : memref<32x64xf32, #tpu.memory_space<vmem>>, vector<2x32xf32>,
    %376 = vector.extract_strided_slice %373 {offsets = [0, 32], sizes = [2, 32], strides = [1, 1]} : vector<2x64xf32> to vector<2x32xf32>
    %c0_121 = arith.constant 0 : index
    %c32_122 = arith.constant 32 : index
    %377 = vector.load %arg8[%c0_121, %c32_122] : memref<32x64xf32, #tpu.memory_space<vmem>>, vector<2x32xf32>
    tpu.vector_store %arg8[%c0_121, %c32_122], %376 {strides = array<i32>} : memref<32x64xf32, #tpu.memory_space<vmem>>, vector<2x32xf32>,
    %c0_123 = arith.constant 0 : index
    %c0_124 = arith.constant 0 : index
    %378 = vector.load %arg8[%c0_123, %c0_124] : memref<32x64xf32, #tpu.memory_space<vmem>>, vector<32x64xf32>
    %c0_125 = arith.constant 0 : index
    %c0_126 = arith.constant 0 : index
    %379 = vector.load %arg4[%c0_125, %c0_126] : memref<64x32xf32, #tpu.memory_space<vmem>>, vector<64x32xf32>
    %cst_127 = arith.constant dense<0.000000e+00> : vector<32x32xf32>
    %380 = tpu.matmul %378, %379, %cst_127 {dimension_numbers = #tpu.dot_dimension_numbers<[1], [0], [0], [1], [0, 0, 1, 1], [], []>} : vector<32x64xf32>, vector<64x32xf32>, vector<32x32xf32> -> vector<32x32xf32>
    %c0_128 = arith.constant 0 : index
    %c0_129 = arith.constant 0 : index
    %381 = vector.load %arg5[%c0_128, %c0_129] : memref<1x32xf32, #tpu.memory_space<vmem>>, vector<1x32xf32>
    %382 = vector.broadcast %381 : vector<1x32xf32> to vector<32x32xf32>
    %383 = arith.addf %380, %382 : vector<32x32xf32>
    %384 = vector.extract_strided_slice %383 {offsets = [0, 0], sizes = [16, 32], strides = [1, 1]} : vector<32x32xf32> to vector<16x32xf32>
    %385 = vector.extract_strided_slice %383 {offsets = [16, 0], sizes = [16, 32], strides = [1, 1]} : vector<32x32xf32> to vector<16x32xf32>
    %386 = arith.maximumf %384, %385 : vector<16x32xf32>
    %387 = vector.extract_strided_slice %386 {offsets = [0, 0], sizes = [8, 32], strides = [1, 1]} : vector<16x32xf32> to vector<8x32xf32>
    %388 = vector.extract_strided_slice %386 {offsets = [8, 0], sizes = [8, 32], strides = [1, 1]} : vector<16x32xf32> to vector<8x32xf32>
    %389 = arith.maximumf %387, %388 : vector<8x32xf32>
    %390 = vector.extract_strided_slice %389 {offsets = [0, 0], sizes = [4, 32], strides = [1, 1]} : vector<8x32xf32> to vector<4x32xf32>
    %391 = vector.extract_strided_slice %389 {offsets = [4, 0], sizes = [4, 32], strides = [1, 1]} : vector<8x32xf32> to vector<4x32xf32>
    %392 = arith.maximumf %390, %391 : vector<4x32xf32>
    %393 = vector.extract_strided_slice %392 {offsets = [0, 0], sizes = [2, 32], strides = [1, 1]} : vector<4x32xf32> to vector<2x32xf32>
    %394 = vector.extract_strided_slice %392 {offsets = [2, 0], sizes = [2, 32], strides = [1, 1]} : vector<4x32xf32> to vector<2x32xf32>
    %395 = arith.maximumf %393, %394 : vector<2x32xf32>
    %c0_130 = arith.constant 0 : index
    %c0_131 = arith.constant 0 : index
    %396 = vector.load %arg6[%c0_130, %c0_131] : memref<2x32xf32, #tpu.memory_space<vmem>>, vector<2x32xf32>
    tpu.vector_store %arg6[%c0_130, %c0_131], %395 {strides = array<i32>} : memref<2x32xf32, #tpu.memory_space<vmem>>, vector<2x32xf32>,
    return
  }
}

</mosaic_0001>

<llo_original>
// kernel: lstmnet_forward.1
$region0: #{lstmnet_forward.1}
  #allocation0 [shape = 'u32[]', space=smem, size = 0x4, offset = 0x4, fixed_abs, tag = 'smem constant byte address 0x4 - core index']
  #allocation1 [shape = 'u32[72,128]{1,0:T(1,128)}', space=vmem, size = 0x9000, scoped, tag = 'internal scratch']
  #allocation2 [shape = 'f32[32,256]{1,0:T(8,128)}', space=vmem, size = 0x8000, scoped, tag = 'scratch operand']
  #allocation3 [shape = 'f32[32,64]{1,0:T(8,128)}', space=vmem, size = 0x4000, scoped, tag = 'scratch operand']
  %s0 = inlined_call_operand.vmem [shape: f32[32,16], index: 0, kind: input, shape index: {}]
  %s1 = inlined_call_operand.vmem [shape: f32[16,256], index: 1, kind: input, shape index: {}]
  %s2 = inlined_call_operand.vmem [shape: f32[1,256], index: 2, kind: input, shape index: {}]
  %s3 = inlined_call_operand.vmem [shape: bf16[64,256], index: 3, kind: input, shape index: {}]
  %s4 = inlined_call_operand.vmem [shape: f32[64,32], index: 4, kind: input, shape index: {}]
  %s5 = inlined_call_operand.vmem [shape: f32[1,32], index: 5, kind: input, shape index: {}]
  %s6 = inlined_call_operand.hbm [shape: f32[2,32], index: 6, kind: output, shape index: {}]
  %s7 = sld [smem:[#allocation0]]
  $region34: #{lstmnet_forward.1} parent=0
    _
  %s9 = ssub.s32 1, %s7
  %s10 = scalar_select 0, %s9, %s7
  $region1: #{lstmnet_forward.1} parent=0
    #allocation4 [shape = 'u8[1024]{0}', space=vmem, size = 0x400, scoped, tag = 'output window, operand 0, single buffered']
    #allocation5 [shape = 's32[1]{0}', space=sflag, size = 0x4, scoped, tag = 'scoped memory for lstmnet_forward.1']
    %11 = vsyncpa [#allocation5], 0
    // Predicated region
    $region2: #{lstmnet_forward.1} parent=1 // pred_check
      _
    $region3: #{lstmnet_forward.1} parent=1 // pred_check_branch
      %13 = sbr.rel (0) target = $region5
    $region4: #{lstmnet_forward.1} parent=1 // pred_region
      _
    $region5: #{lstmnet_forward.1} parent=1 // pred_fallthru
      _
    // Predicated region
    $region6: #{lstmnet_forward.1} parent=1 // pred_check
      _
    $region7: #{lstmnet_forward.1} parent=1 // pred_check_branch
      %15 = sbr.rel (0) target = $region9
    $region8: #{lstmnet_forward.1} parent=1 // pred_region
      _
    $region9: #{lstmnet_forward.1} parent=1 // pred_fallthru
      _
    // Predicated region
    $region10: #{lstmnet_forward.1} parent=1 // pred_check
      _
    $region11: #{lstmnet_forward.1} parent=1 // pred_check_branch
      %17 = sbr.rel (0) target = $region13
    $region12: #{lstmnet_forward.1} parent=1 // pred_region
      _
    $region13: #{lstmnet_forward.1} parent=1 // pred_fallthru
      _
    // Predicated region
    $region14: #{lstmnet_forward.1} parent=1 // pred_check
      _
    $region15: #{lstmnet_forward.1} parent=1 // pred_check_branch
      %19 = sbr.rel (0) target = $region17
    $region16: #{lstmnet_forward.1} parent=1 // pred_region
      _
    $region17: #{lstmnet_forward.1} parent=1 // pred_fallthru
      _
    // Predicated region
    $region18: #{lstmnet_forward.1} parent=1 // pred_check
      _
    $region19: #{lstmnet_forward.1} parent=1 // pred_check_branch
      %21 = sbr.rel (0) target = $region21
    $region20: #{lstmnet_forward.1} parent=1 // pred_region
      _
    $region21: #{lstmnet_forward.1} parent=1 // pred_fallthru
      _
    // Predicated region
    $region22: #{lstmnet_forward.1} parent=1 // pred_check
      _
    $region23: #{lstmnet_forward.1} parent=1 // pred_check_branch
      %23 = sbr.rel (0) target = $region25
    $region24: #{lstmnet_forward.1} parent=1 // pred_region
      _
    $region25: #{lstmnet_forward.1} parent=1 // pred_fallthru
      _
    %v25 = vld [vmem:[%s0] sm:$0xff]
    %v26 = vld [vmem:[%s0 + $0x8] sm:$0xff]
    %v27 = vld [vmem:[%s0 + $0x10] sm:$0xff]
    %v28 = vld [vmem:[%s0 + $0x18] sm:$0xff]
    %v29 = vld [vmem:[%s1] sm:$0xff]
    %v30 = vld [vmem:[%s1 + $0x8] sm:$0xff]
    %v31 = vld [vmem:[%s1 + $0x10] sm:$0xff]
    %v32 = vld [vmem:[%s1 + $0x18] sm:$0xff]
    %v33 = vld [vmem:[%s2] sm:$0x3]
    %v35 = vperm.slane %v33, 0
    %v36 = vperm.slane %v33, 1
    %vm39 = vcmask 130048
    %v41 = vsel %vm39, %v25, 0
    %v44 = vsel %vm39, %v26, 0
    %v47 = vsel %vm39, %v27, 0
    %v50 = vsel %vm39, %v28, 0
    %52 = vmatpush.msra.mxu0 0.0
    %53 = vmatpush.msra.mxu0 0.0
    %54 = vmatpush.msra.mxu0 0.0
    %55 = vmatpush.msra.mxu0 0.0
    %56 = vmatpush.msra.mxu0 0.0
    %57 = vmatpush.msra.mxu0 0.0
    %58 = vmatpush.msra.mxu0 0.0
    %59 = vmatpush.msra.mxu0 0.0
    %60 = vmatpush.msra.mxu0 0.0
    %61 = vmatpush.msra.mxu0 0.0
    %62 = vmatpush.msra.mxu0 0.0
    %63 = vmatpush.msra.mxu0 0.0
    %64 = vmatpush.msra.mxu0 0.0
    %65 = vmatpush.msra.mxu0 0.0
    %66 = vmatpush.msra.mxu0 %v31
    %67 = vmatpush.msra.mxu0 %v29
    %68 = vmatmul.f32.gmra.mxu0 %v41
    %v69 = vpop.f32.mrf.mxu0
    %v70 = vadd.f32 %v35, %v69
    %71 = vmatmul.f32.gmra.mxu0 %v44
    %v72 = vpop.f32.mrf.mxu0
    %v73 = vadd.f32 %v35, %v72
    %74 = vmatmul.f32.gmra.mxu0 %v47
    %v75 = vpop.f32.mrf.mxu0
    %v76 = vadd.f32 %v35, %v75
    %77 = vmatmul.f32.gmra.mxu0 %v50
    %v78 = vpop.f32.mrf.mxu0
    %v79 = vadd.f32 %v35, %v78
    %80 = vdwg.mxu0
    %81 = vmatpush.msra.mxu0 0.0
    %82 = vmatpush.msra.mxu0 0.0
    %83 = vmatpush.msra.mxu0 0.0
    %84 = vmatpush.msra.mxu0 0.0
    %85 = vmatpush.msra.mxu0 0.0
    %86 = vmatpush.msra.mxu0 0.0
    %87 = vmatpush.msra.mxu0 0.0
    %88 = vmatpush.msra.mxu0 0.0
    %89 = vmatpush.msra.mxu0 0.0
    %90 = vmatpush.msra.mxu0 0.0
    %91 = vmatpush.msra.mxu0 0.0
    %92 = vmatpush.msra.mxu0 0.0
    %93 = vmatpush.msra.mxu0 0.0
    %94 = vmatpush.msra.mxu0 0.0
    %95 = vmatpush.msra.mxu0 %v32
    %96 = vmatpush.msra.mxu0 %v30
    %97 = vmatmul.f32.gmra.mxu0 %v41
    %v98 = vpop.f32.mrf.mxu0
    %v99 = vadd.f32 %v36, %v98
    %100 = vmatmul.f32.gmra.mxu0 %v44
    %v101 = vpop.f32.mrf.mxu0
    %v102 = vadd.f32 %v36, %v101
    %103 = vmatmul.f32.gmra.mxu0 %v47
    %v104 = vpop.f32.mrf.mxu0
    %v105 = vadd.f32 %v36, %v104
    %106 = vmatmul.f32.gmra.mxu0 %v50
    %v107 = vpop.f32.mrf.mxu0
    %v108 = vadd.f32 %v36, %v107
    %109 = vdwg.mxu0
    %110 = vst [vmem:[#allocation2] sm:$0xff] %v70
    %111 = vst [vmem:[#allocation2 + $0x8] sm:$0xff] %v99
    %112 = vst [vmem:[#allocation2 + $0x10] sm:$0xff] %v73
    %113 = vst [vmem:[#allocation2 + $0x18] sm:$0xff] %v102
    %114 = vst [vmem:[#allocation2 + $0x20] sm:$0xff] %v76
    %115 = vst [vmem:[#allocation2 + $0x28] sm:$0xff] %v105
    %116 = vst [vmem:[#allocation2 + $0x30] sm:$0xff] %v79
    %117 = vst [vmem:[#allocation2 + $0x38] sm:$0xff] %v108
    %v118 = vld [vmem:[%s3] sm:$0xff]
    %v119 = vld [vmem:[%s3 + $0x8] sm:$0xff]
    %v120 = vld [vmem:[%s3 + $0x10] sm:$0xff]
    %v121 = vld [vmem:[%s3 + $0x18] sm:$0xff]
    %v122 = vld [vmem:[%s3 + $0x20] sm:$0xff]
    %v123 = vld [vmem:[%s3 + $0x28] sm:$0xff]
    %v124 = vld [vmem:[%s3 + $0x30] sm:$0xff]
    %v125 = vld [vmem:[%s3 + $0x38] sm:$0xff]
    %v126 = vld [vmem:[#allocation2] sm:$0x3]
    %v127 = vld [vmem:[#allocation2 + $0x8] sm:$0x3]
    %v136 = vunpack.c.l.b16 %v118
    %v137 = vunpack.c.h.b16 %v118
    %v138 = vunpack.c.l.b16 %v119
    %v139 = vunpack.c.h.b16 %v119
    %v140 = vunpack.c.l.b16 %v120
    %v141 = vunpack.c.h.b16 %v120
    %v142 = vunpack.c.l.b16 %v121
    %v143 = vunpack.c.h.b16 %v121
    %v144 = vunpack.c.l.b16 %v122
    %v145 = vunpack.c.h.b16 %v122
    %v146 = vunpack.c.l.b16 %v123
    %v147 = vunpack.c.h.b16 %v123
    %v148 = vunpack.c.l.b16 %v124
    %v149 = vunpack.c.h.b16 %v124
    %v150 = vunpack.c.l.b16 %v125
    %v151 = vunpack.c.h.b16 %v125
    %v152 = vpack.c.b16 %v138, %v136
    %v153 = vpack.c.b16 %v139, %v137
    %v154 = vpack.c.b16 %v142, %v140
    %v155 = vpack.c.b16 %v143, %v141
    %v156 = vpack.c.b16 %v146, %v144
    %v157 = vpack.c.b16 %v147, %v145
    %v158 = vpack.c.b16 %v150, %v148
    %v159 = vpack.c.b16 %v151, %v149
    %vm168 = vcmask 523264
    %v170 = vsel %vm168, 0, 0
    %172 = vmatpush.bf16.msra.mxu0 0
    %173 = vmatpush.bf16.msra.mxu0 0
    %174 = vmatpush.bf16.msra.mxu0 0
    %175 = vmatpush.bf16.msra.mxu0 0
    %176 = vmatpush.bf16.msra.mxu0 %v158
    %177 = vmatpush.bf16.msra.mxu0 %v156
    %178 = vmatpush.bf16.msra.mxu0 %v154
    %179 = vmatpush.bf16.msra.mxu0 %v152
    %180 = vmatmul.bf16.gmra.mxu0 %v170
    %v181 = vpop.f32.mrf.mxu0
    %v182 = vadd.f32 0.0, %v181
    %v183 = vpop.f32.mrf.mxu0
    %184 = vdwg.mxu0
    %185 = vmatpush.bf16.msra.mxu0 0
    %186 = vmatpush.bf16.msra.mxu0 0
    %187 = vmatpush.bf16.msra.mxu0 0
    %188 = vmatpush.bf16.msra.mxu0 0
    %189 = vmatpush.bf16.msra.mxu0 %v159
    %190 = vmatpush.bf16.msra.mxu0 %v157
    %191 = vmatpush.bf16.msra.mxu0 %v155
    %192 = vmatpush.bf16.msra.mxu0 %v153
    %193 = vmatmul.bf16.gmra.mxu0 %v170
    %v194 = vpop.f32.mrf.mxu0
    %v195 = vadd.f32 0.0, %v194
    %v196 = vpop.f32.mrf.mxu0
    %197 = vdwg.mxu0
    %v198 = vadd.f32 %v126, %v182
    %v199 = vadd.f32 %v127, %v195
    %v200 = vxor.u32 %v198, 2147483648
    %v201 = vxor.u32 %v199, 2147483648
    %v202 = vmul.f32 %v200, 1.442695
    %v203 = vpow.pop %v202
    %v204 = vmul.f32 %v201, 1.442695
    %v205 = vpow.pop %v204
    %v206 = vadd.f32 %v203, 1.0
    %v207 = vadd.f32 %v205, 1.0
    %v208 = vrcp.pop %v206
    %v209 = vmul.f32 %v206, %v208
    %v210 = vsub.f32 1.0, %v209
    %v211 = vmul.f32 %v208, %v210
    %v212 = vadd.f32 %v208, %v211
    %vm213 = vweird.f32 %v206
    %vm214 = vweird.f32 %v208
    %vm215 = vmor %vm213, %vm214
    %v216 = vsel %vm215, %v208, %v212
    %v217 = vand.u32 2147483647, %v206
    %vm218 = vcmp.eq.f32.partialorder %v217, 8.507059e+37
    %v219 = vand.u32 %v206, 2147483648
    %v220 = vor.u32 1.1754944e-38, %v219
    %v221 = vsel %vm218, %v220, %v216
    %v222 = vmul.f32 1.0, %v221
    %v223 = vrcp.pop %v207
    %v224 = vmul.f32 %v207, %v223
    %v225 = vsub.f32 1.0, %v224
    %v226 = vmul.f32 %v223, %v225
    %v227 = vadd.f32 %v223, %v226
    %vm228 = vweird.f32 %v207
    %vm229 = vweird.f32 %v223
    %vm230 = vmor %vm228, %vm229
    %v231 = vsel %vm230, %v223, %v227
    %v232 = vand.u32 2147483647, %v207
    %vm233 = vcmp.eq.f32.partialorder %v232, 8.507059e+37
    %v234 = vand.u32 %v207, 2147483648
    %v235 = vor.u32 1.1754944e-38, %v234
    %v236 = vsel %vm233, %v235, %v231
    %v237 = vmul.f32 1.0, %v236
    %v238 = vtanh.pop %v199
    %v239 = vmul.f32 %v222, 0.0
    %v240 = vmul.f32 %v222, %v238
    %242 = vrot.lane.b32.xlu0 %v240, 64
    %v243 = vpop.permute.xlu0 %242
    %v245 = vadd.f32 %v239, %v243
    %v246 = vtanh.pop %v245
    %v247 = vmul.f32 %v237, %v246
    %249 = vrot.lane.b32.xlu0 %v247, 64
    %v250 = vpop.permute.xlu0 %249
    %vm252 = vcmask 254976
    %253 = vst.msk [vmem:[#allocation3] sm:$0x3] %vm252, %v250
    %vm254 = vcmask 517376
    %255 = vst.msk [vmem:[#allocation3 + $0x1e] sm:$0x3] %vm254, %v250
    %v256 = vld [vmem:[#allocation2] sm:$0xc]
    %v257 = vld [vmem:[#allocation2 + $0x8] sm:$0xc]
    %v258 = vpack.c.bf16 %v247, %v247
    %260 = vrot.lane.b32.xlu0 %v258, 64
    %v261 = vpop.permute.xlu0 %260
    %v263 = vsel %vm168, %v261, 0
    %265 = vmatpush.bf16.msra.mxu0 0
    %266 = vmatpush.bf16.msra.mxu0 0
    %267 = vmatpush.bf16.msra.mxu0 0
    %268 = vmatpush.bf16.msra.mxu0 0
    %269 = vmatpush.bf16.msra.mxu0 %v158
    %270 = vmatpush.bf16.msra.mxu0 %v156
    %271 = vmatpush.bf16.msra.mxu0 %v154
    %272 = vmatpush.bf16.msra.mxu0 %v152
    %273 = vmatmul.bf16.gmra.mxu0 %v263
    %v274 = vpop.f32.mrf.mxu0
    %v275 = vadd.f32 0.0, %v274
    %v276 = vpop.f32.mrf.mxu0
    %277 = vdwg.mxu0
    %278 = vmatpush.bf16.msra.mxu0 0
    %279 = vmatpush.bf16.msra.mxu0 0
    %280 = vmatpush.bf16.msra.mxu0 0
    %281 = vmatpush.bf16.msra.mxu0 0
    %282 = vmatpush.bf16.msra.mxu0 %v159
    %283 = vmatpush.bf16.msra.mxu0 %v157
    %284 = vmatpush.bf16.msra.mxu0 %v155
    %285 = vmatpush.bf16.msra.mxu0 %v153
    %286 = vmatmul.bf16.gmra.mxu0 %v263
    %v287 = vpop.f32.mrf.mxu0
    %v288 = vadd.f32 0.0, %v287
    %v289 = vpop.f32.mrf.mxu0
    %290 = vdwg.mxu0
    %v293 = vrot.slane %v275, 6
    %v294 = vrot.slane %v288, 6
    %v297 = vadd.f32 %v256, %v293
    %v298 = vadd.f32 %v257, %v294
    %v299 = vxor.u32 %v297, 2147483648
    %v300 = vxor.u32 %v298, 2147483648
    %v301 = vmul.f32 %v299, 1.442695
    %v302 = vpow.pop %v301
    %v303 = vmul.f32 %v300, 1.442695
    %v304 = vpow.pop %v303
    %v305 = vadd.f32 %v302, 1.0
    %v306 = vadd.f32 %v304, 1.0
    %v307 = vrcp.pop %v305
    %v308 = vmul.f32 %v305, %v307
    %v309 = vsub.f32 1.0, %v308
    %v310 = vmul.f32 %v307, %v309
    %v311 = vadd.f32 %v307, %v310
    %vm312 = vweird.f32 %v305
    %vm313 = vweird.f32 %v307
    %vm314 = vmor %vm312, %vm313
    %v315 = vsel %vm314, %v307, %v311
    %v316 = vand.u32 2147483647, %v305
    %vm317 = vcmp.eq.f32.partialorder %v316, 8.507059e+37
    %v318 = vand.u32 %v305, 2147483648
    %v319 = vor.u32 1.1754944e-38, %v318
    %v320 = vsel %vm317, %v319, %v315
    %v321 = vmul.f32 1.0, %v320
    %v322 = vrcp.pop %v306
    %v323 = vmul.f32 %v306, %v322
    %v324 = vsub.f32 1.0, %v323
    %v325 = vmul.f32 %v322, %v324
    %v326 = vadd.f32 %v322, %v325
    %vm327 = vweird.f32 %v306
    %vm328 = vweird.f32 %v322
    %vm329 = vmor %vm327, %vm328
    %v330 = vsel %vm329, %v322, %v326
    %v331 = vand.u32 2147483647, %v306
    %vm332 = vcmp.eq.f32.partialorder %v331, 8.507059e+37
    %v333 = vand.u32 %v306, 2147483648
    %v334 = vor.u32 1.1754944e-38, %v333
    %v335 = vsel %vm332, %v334, %v330
    %v336 = vmul.f32 1.0, %v335
    %v337 = vtanh.pop %v298
    %v339 = vrot.slane %v245, 6
    %v341 = vmul.f32 %v321, %v339
    %v342 = vmul.f32 %v321, %v337
    %344 = vrot.lane.b32.xlu0 %v342, 64
    %v345 = vpop.permute.xlu0 %344
    %v347 = vadd.f32 %v341, %v345
    %v348 = vtanh.pop %v347
    %v349 = vmul.f32 %v336, %v348
    %351 = vrot.lane.b32.xlu0 %v349, 64
    %v352 = vpop.permute.xlu0 %351
    %vm354 = vcmask 257026
    %355 = vst.msk [vmem:[#allocation3] sm:$0xc] %vm354, %v352
    %vm356 = vcmask 519426
    %357 = vst.msk [vmem:[#allocation3 + $0x1a] sm:$0xc] %vm356, %v352
    %v358 = vld [vmem:[#allocation2] sm:$0x30]
    %v359 = vld [vmem:[#allocation2 + $0x8] sm:$0x30]
    %v360 = vpack.c.bf16 %v349, %v349
    %v362 = vrot.slane %v360, 1
    %363 = vrot.lane.b32.xlu0 %v362, 64
    %v364 = vpop.permute.xlu0 %363
    %v366 = vsel %vm168, %v364, 0
    %368 = vmatpush.bf16.msra.mxu0 0
    %369 = vmatpush.bf16.msra.mxu0 0
    %370 = vmatpush.bf16.msra.mxu0 0
    %371 = vmatpush.bf16.msra.mxu0 0
    %372 = vmatpush.bf16.msra.mxu0 %v158
    %373 = vmatpush.bf16.msra.mxu0 %v156
    %374 = vmatpush.bf16.msra.mxu0 %v154
    %375 = vmatpush.bf16.msra.mxu0 %v152
    %376 = vmatmul.bf16.gmra.mxu0 %v366
    %v377 = vpop.f32.mrf.mxu0
    %v378 = vadd.f32 0.0, %v377
    %v379 = vpop.f32.mrf.mxu0
    %380 = vdwg.mxu0
    %381 = vmatpush.bf16.msra.mxu0 0
    %382 = vmatpush.bf16.msra.mxu0 0
    %383 = vmatpush.bf16.msra.mxu0 0
    %384 = vmatpush.bf16.msra.mxu0 0
    %385 = vmatpush.bf16.msra.mxu0 %v159
    %386 = vmatpush.bf16.msra.mxu0 %v157
    %387 = vmatpush.bf16.msra.mxu0 %v155
    %388 = vmatpush.bf16.msra.mxu0 %v153
    %389 = vmatmul.bf16.gmra.mxu0 %v366
    %v390 = vpop.f32.mrf.mxu0
    %v391 = vadd.f32 0.0, %v390
    %v392 = vpop.f32.mrf.mxu0
    %393 = vdwg.mxu0
    %v396 = vrot.slane %v378, 4
    %v397 = vrot.slane %v391, 4
    %v400 = vadd.f32 %v358, %v396
    %v401 = vadd.f32 %v359, %v397
    %v402 = vxor.u32 %v400, 2147483648
    %v403 = vxor.u32 %v401, 2147483648
    %v404 = vmul.f32 %v402, 1.442695
    %v405 = vpow.pop %v404
    %v406 = vmul.f32 %v403, 1.442695
    %v407 = vpow.pop %v406
    %v408 = vadd.f32 %v405, 1.0
    %v409 = vadd.f32 %v407, 1.0
    %v410 = vrcp.pop %v408
    %v411 = vmul.f32 %v408, %v410
    %v412 = vsub.f32 1.0, %v411
    %v413 = vmul.f32 %v410, %v412
    %v414 = vadd.f32 %v410, %v413
    %vm415 = vweird.f32 %v408
    %vm416 = vweird.f32 %v410
    %vm417 = vmor %vm415, %vm416
    %v418 = vsel %vm417, %v410, %v414
    %v419 = vand.u32 2147483647, %v408
    %vm420 = vcmp.eq.f32.partialorder %v419, 8.507059e+37
    %v421 = vand.u32 %v408, 2147483648
    %v422 = vor.u32 1.1754944e-38, %v421
    %v423 = vsel %vm420, %v422, %v418
    %v424 = vmul.f32 1.0, %v423
    %v425 = vrcp.pop %v409
    %v426 = vmul.f32 %v409, %v425
    %v427 = vsub.f32 1.0, %v426
    %v428 = vmul.f32 %v425, %v427
    %v429 = vadd.f32 %v425, %v428
    %vm430 = vweird.f32 %v409
    %vm431 = vweird.f32 %v425
    %vm432 = vmor %vm430, %vm431
    %v433 = vsel %vm432, %v425, %v429
    %v434 = vand.u32 2147483647, %v409
    %vm435 = vcmp.eq.f32.partialorder %v434, 8.507059e+37
    %v436 = vand.u32 %v409, 2147483648
    %v437 = vor.u32 1.1754944e-38, %v436
    %v438 = vsel %vm435, %v437, %v433
    %v439 = vmul.f32 1.0, %v438
    %v440 = vtanh.pop %v401
    %v442 = vrot.slane %v347, 6
    %v444 = vmul.f32 %v424, %v442
    %v445 = vmul.f32 %v424, %v440
    %447 = vrot.lane.b32.xlu0 %v445, 64
    %v448 = vpop.permute.xlu0 %447
    %v450 = vadd.f32 %v444, %v448
    %v451 = vtanh.pop %v450
    %v452 = vmul.f32 %v439, %v451
    %454 = vrot.lane.b32.xlu0 %v452, 64
    %v455 = vpop.permute.xlu0 %454
    %vm457 = vcmask 259076
    %458 = vst.msk [vmem:[#allocation3] sm:$0x30] %vm457, %v455
    %vm459 = vcmask 521476
    %460 = vst.msk [vmem:[#allocation3 + $0x16] sm:$0x30] %vm459, %v455
    %v461 = vld [vmem:[#allocation2] sm:$0xc0]
    %v462 = vld [vmem:[#allocation2 + $0x8] sm:$0xc0]
    %v463 = vpack.c.bf16 %v452, %v452
    %v465 = vrot.slane %v463, 2
    %466 = vrot.lane.b32.xlu0 %v465, 64
    %v467 = vpop.permute.xlu0 %466
    %v469 = vsel %vm168, %v467, 0
    %471 = vmatpush.bf16.msra.mxu0 0
    %472 = vmatpush.bf16.msra.mxu0 0
    %473 = vmatpush.bf16.msra.mxu0 0
    %474 = vmatpush.bf16.msra.mxu0 0
    %475 = vmatpush.bf16.msra.mxu0 %v158
    %476 = vmatpush.bf16.msra.mxu0 %v156
    %477 = vmatpush.bf16.msra.mxu0 %v154
    %478 = vmatpush.bf16.msra.mxu0 %v152
    %479 = vmatmul.bf16.gmra.mxu0 %v469
    %v480 = vpop.f32.mrf.mxu0
    %v481 = vadd.f32 0.0, %v480
    %v482 = vpop.f32.mrf.mxu0
    %483 = vdwg.mxu0
    %484 = vmatpush.bf16.msra.mxu0 0
    %485 = vmatpush.bf16.msra.mxu0 0
    %486 = vmatpush.bf16.msra.mxu0 0
    %487 = vmatpush.bf16.msra.mxu0 0
    %488 = vmatpush.bf16.msra.mxu0 %v159
    %489 = vmatpush.bf16.msra.mxu0 %v157
    %490 = vmatpush.bf16.msra.mxu0 %v155
    %491 = vmatpush.bf16.msra.mxu0 %v153
    %492 = vmatmul.bf16.gmra.mxu0 %v469
    %v493 = vpop.f32.mrf.mxu0
    %v494 = vadd.f32 0.0, %v493
    %v495 = vpop.f32.mrf.mxu0
    %496 = vdwg.mxu0
    %v499 = vrot.slane %v481, 2
    %v500 = vrot.slane %v494, 2
    %v503 = vadd.f32 %v461, %v499
    %v504 = vadd.f32 %v462, %v500
    %v505 = vxor.u32 %v503, 2147483648
    %v506 = vxor.u32 %v504, 2147483648
    %v507 = vmul.f32 %v505, 1.442695
    %v508 = vpow.pop %v507
    %v509 = vmul.f32 %v506, 1.442695
    %v510 = vpow.pop %v509
    %v511 = vadd.f32 %v508, 1.0
    %v512 = vadd.f32 %v510, 1.0
    %v513 = vrcp.pop %v511
    %v514 = vmul.f32 %v511, %v513
    %v515 = vsub.f32 1.0, %v514
    %v516 = vmul.f32 %v513, %v515
    %v517 = vadd.f32 %v513, %v516
    %vm518 = vweird.f32 %v511
    %vm519 = vweird.f32 %v513
    %vm520 = vmor %vm518, %vm519
    %v521 = vsel %vm520, %v513, %v517
    %v522 = vand.u32 2147483647, %v511
    %vm523 = vcmp.eq.f32.partialorder %v522, 8.507059e+37
    %v524 = vand.u32 %v511, 2147483648
    %v525 = vor.u32 1.1754944e-38, %v524
    %v526 = vsel %vm523, %v525, %v521
    %v527 = vmul.f32 1.0, %v526
    %v528 = vrcp.pop %v512
    %v529 = vmul.f32 %v512, %v528
    %v530 = vsub.f32 1.0, %v529
    %v531 = vmul.f32 %v528, %v530
    %v532 = vadd.f32 %v528, %v531
    %vm533 = vweird.f32 %v512
    %vm534 = vweird.f32 %v528
    %vm535 = vmor %vm533, %vm534
    %v536 = vsel %vm535, %v528, %v532
    %v537 = vand.u32 2147483647, %v512
    %vm538 = vcmp.eq.f32.partialorder %v537, 8.507059e+37
    %v539 = vand.u32 %v512, 2147483648
    %v540 = vor.u32 1.1754944e-38, %v539
    %v541 = vsel %vm538, %v540, %v536
    %v542 = vmul.f32 1.0, %v541
    %v543 = vtanh.pop %v504
    %v545 = vrot.slane %v450, 6
    %v547 = vmul.f32 %v527, %v545
    %v548 = vmul.f32 %v527, %v543
    %550 = vrot.lane.b32.xlu0 %v548, 64
    %v551 = vpop.permute.xlu0 %550
    %v553 = vadd.f32 %v547, %v551
    %v554 = vtanh.pop %v553
    %v555 = vmul.f32 %v542, %v554
    %557 = vrot.lane.b32.xlu0 %v555, 64
    %v558 = vpop.permute.xlu0 %557
    %vm560 = vcmask 261126
    %561 = vst.msk [vmem:[#allocation3] sm:$0xc0] %vm560, %v558
    %vm562 = vcmask 523526
    %563 = vst.msk [vmem:[#allocation3 + $0x12] sm:$0xc0] %vm562, %v558
    %v564 = vld [vmem:[#allocation2 + $0x10] sm:$0x3]
    %v565 = vld [vmem:[#allocation2 + $0x18] sm:$0x3]
    %v566 = vpack.c.bf16 %v555, %v555
    %v568 = vrot.slane %v566, 3
    %569 = vrot.lane.b32.xlu0 %v568, 64
    %v570 = vpop.permute.xlu0 %569
    %v572 = vsel %vm168, %v570, 0
    %574 = vmatpush.bf16.msra.mxu0 0
    %575 = vmatpush.bf16.msra.mxu0 0
    %576 = vmatpush.bf16.msra.mxu0 0
    %577 = vmatpush.bf16.msra.mxu0 0
    %578 = vmatpush.bf16.msra.mxu0 %v158
    %579 = vmatpush.bf16.msra.mxu0 %v156
    %580 = vmatpush.bf16.msra.mxu0 %v154
    %581 = vmatpush.bf16.msra.mxu0 %v152
    %582 = vmatmul.bf16.gmra.mxu0 %v572
    %v583 = vpop.f32.mrf.mxu0
    %v584 = vadd.f32 0.0, %v583
    %v585 = vpop.f32.mrf.mxu0
    %586 = vdwg.mxu0
    %587 = vmatpush.bf16.msra.mxu0 0
    %588 = vmatpush.bf16.msra.mxu0 0
    %589 = vmatpush.bf16.msra.mxu0 0
    %590 = vmatpush.bf16.msra.mxu0 0
    %591 = vmatpush.bf16.msra.mxu0 %v159
    %592 = vmatpush.bf16.msra.mxu0 %v157
    %593 = vmatpush.bf16.msra.mxu0 %v155
    %594 = vmatpush.bf16.msra.mxu0 %v153
    %595 = vmatmul.bf16.gmra.mxu0 %v572
    %v596 = vpop.f32.mrf.mxu0
    %v597 = vadd.f32 0.0, %v596
    %v598 = vpop.f32.mrf.mxu0
    %599 = vdwg.mxu0
    %v600 = vadd.f32 %v564, %v584
    %v601 = vadd.f32 %v565, %v597
    %v602 = vxor.u32 %v600, 2147483648
    %v603 = vxor.u32 %v601, 2147483648
    %v604 = vmul.f32 %v602, 1.442695
    %v605 = vpow.pop %v604
    %v606 = vmul.f32 %v603, 1.442695
    %v607 = vpow.pop %v606
    %v608 = vadd.f32 %v605, 1.0
    %v609 = vadd.f32 %v607, 1.0
    %v610 = vrcp.pop %v608
    %v611 = vmul.f32 %v608, %v610
    %v612 = vsub.f32 1.0, %v611
    %v613 = vmul.f32 %v610, %v612
    %v614 = vadd.f32 %v610, %v613
    %vm615 = vweird.f32 %v608
    %vm616 = vweird.f32 %v610
    %vm617 = vmor %vm615, %vm616
    %v618 = vsel %vm617, %v610, %v614
    %v619 = vand.u32 2147483647, %v608
    %vm620 = vcmp.eq.f32.partialorder %v619, 8.507059e+37
    %v621 = vand.u32 %v608, 2147483648
    %v622 = vor.u32 1.1754944e-38, %v621
    %v623 = vsel %vm620, %v622, %v618
    %v624 = vmul.f32 1.0, %v623
    %v625 = vrcp.pop %v609
    %v626 = vmul.f32 %v609, %v625
    %v627 = vsub.f32 1.0, %v626
    %v628 = vmul.f32 %v625, %v627
    %v629 = vadd.f32 %v625, %v628
    %vm630 = vweird.f32 %v609
    %vm631 = vweird.f32 %v625
    %vm632 = vmor %vm630, %vm631
    %v633 = vsel %vm632, %v625, %v629
    %v634 = vand.u32 2147483647, %v609
    %vm635 = vcmp.eq.f32.partialorder %v634, 8.507059e+37
    %v636 = vand.u32 %v609, 2147483648
    %v637 = vor.u32 1.1754944e-38, %v636
    %v638 = vsel %vm635, %v637, %v633
    %v639 = vmul.f32 1.0, %v638
    %v640 = vtanh.pop %v601
    %v642 = vrot.slane %v553, 6
    %v644 = vmul.f32 %v624, %v642
    %v645 = vmul.f32 %v624, %v640
    %647 = vrot.lane.b32.xlu0 %v645, 64
    %v648 = vpop.permute.xlu0 %647
    %v650 = vadd.f32 %v644, %v648
    %v651 = vtanh.pop %v650
    %v652 = vmul.f32 %v639, %v651
    %654 = vrot.lane.b32.xlu0 %v652, 64
    %v655 = vpop.permute.xlu0 %654
    %657 = vst.msk [vmem:[#allocation3 + $0x8] sm:$0x3] %vm252, %v655
    %658 = vst.msk [vmem:[#allocation3 + $0x16] sm:$0x3] %vm254, %v655
    %v659 = vld [vmem:[#allocation2 + $0x10] sm:$0xc]
    %v660 = vld [vmem:[#allocation2 + $0x18] sm:$0xc]
    %v661 = vpack.c.bf16 %v652, %v652
    %663 = vrot.lane.b32.xlu0 %v661, 64
    %v664 = vpop.permute.xlu0 %663
    %v666 = vsel %vm168, %v664, 0
    %668 = vmatpush.bf16.msra.mxu0 0
    %669 = vmatpush.bf16.msra.mxu0 0
    %670 = vmatpush.bf16.msra.mxu0 0
    %671 = vmatpush.bf16.msra.mxu0 0
    %672 = vmatpush.bf16.msra.mxu0 %v158
    %673 = vmatpush.bf16.msra.mxu0 %v156
    %674 = vmatpush.bf16.msra.mxu0 %v154
    %675 = vmatpush.bf16.msra.mxu0 %v152
    %676 = vmatmul.bf16.gmra.mxu0 %v666
    %v677 = vpop.f32.mrf.mxu0
    %v678 = vadd.f32 0.0, %v677
    %v679 = vpop.f32.mrf.mxu0
    %680 = vdwg.mxu0
    %681 = vmatpush.bf16.msra.mxu0 0
    %682 = vmatpush.bf16.msra.mxu0 0
    %683 = vmatpush.bf16.msra.mxu0 0
    %684 = vmatpush.bf16.msra.mxu0 0
    %685 = vmatpush.bf16.msra.mxu0 %v159
    %686 = vmatpush.bf16.msra.mxu0 %v157
    %687 = vmatpush.bf16.msra.mxu0 %v155
    %688 = vmatpush.bf16.msra.mxu0 %v153
    %689 = vmatmul.bf16.gmra.mxu0 %v666
    %v690 = vpop.f32.mrf.mxu0
    %v691 = vadd.f32 0.0, %v690
    %v692 = vpop.f32.mrf.mxu0
    %693 = vdwg.mxu0
    %v696 = vrot.slane %v678, 6
    %v697 = vrot.slane %v691, 6
    %v700 = vadd.f32 %v659, %v696
    %v701 = vadd.f32 %v660, %v697
    %v702 = vxor.u32 %v700, 2147483648
    %v703 = vxor.u32 %v701, 2147483648
    %v704 = vmul.f32 %v702, 1.442695
    %v705 = vpow.pop %v704
    %v706 = vmul.f32 %v703, 1.442695
    %v707 = vpow.pop %v706
    %v708 = vadd.f32 %v705, 1.0
    %v709 = vadd.f32 %v707, 1.0
    %v710 = vrcp.pop %v708
    %v711 = vmul.f32 %v708, %v710
    %v712 = vsub.f32 1.0, %v711
    %v713 = vmul.f32 %v710, %v712
    %v714 = vadd.f32 %v710, %v713
    %vm715 = vweird.f32 %v708
    %vm716 = vweird.f32 %v710
    %vm717 = vmor %vm715, %vm716
    %v718 = vsel %vm717, %v710, %v714
    %v719 = vand.u32 2147483647, %v708
    %vm720 = vcmp.eq.f32.partialorder %v719, 8.507059e+37
    %v721 = vand.u32 %v708, 2147483648
    %v722 = vor.u32 1.1754944e-38, %v721
    %v723 = vsel %vm720, %v722, %v718
    %v724 = vmul.f32 1.0, %v723
    %v725 = vrcp.pop %v709
    %v726 = vmul.f32 %v709, %v725
    %v727 = vsub.f32 1.0, %v726
    %v728 = vmul.f32 %v725, %v727
    %v729 = vadd.f32 %v725, %v728
    %vm730 = vweird.f32 %v709
    %vm731 = vweird.f32 %v725
    %vm732 = vmor %vm730, %vm731
    %v733 = vsel %vm732, %v725, %v729
    %v734 = vand.u32 2147483647, %v709
    %vm735 = vcmp.eq.f32.partialorder %v734, 8.507059e+37
    %v736 = vand.u32 %v709, 2147483648
    %v737 = vor.u32 1.1754944e-38, %v736
    %v738 = vsel %vm735, %v737, %v733
    %v739 = vmul.f32 1.0, %v738
    %v740 = vtanh.pop %v701
    %v742 = vrot.slane %v650, 6
    %v744 = vmul.f32 %v724, %v742
    %v745 = vmul.f32 %v724, %v740
    %747 = vrot.lane.b32.xlu0 %v745, 64
    %v748 = vpop.permute.xlu0 %747
    %v750 = vadd.f32 %v744, %v748
    %v751 = vtanh.pop %v750
    %v752 = vmul.f32 %v739, %v751
    %754 = vrot.lane.b32.xlu0 %v752, 64
    %v755 = vpop.permute.xlu0 %754
    %757 = vst.msk [vmem:[#allocation3 + $0x8] sm:$0xc] %vm354, %v755
    %758 = vst.msk [vmem:[#allocation3 + $0x12] sm:$0xc] %vm356, %v755
    %v759 = vld [vmem:[#allocation2 + $0x10] sm:$0x30]
    %v760 = vld [vmem:[#allocation2 + $0x18] sm:$0x30]
    %v761 = vpack.c.bf16 %v752, %v752
    %v763 = vrot.slane %v761, 1
    %764 = vrot.lane.b32.xlu0 %v763, 64
    %v765 = vpop.permute.xlu0 %764
    %v767 = vsel %vm168, %v765, 0
    %769 = vmatpush.bf16.msra.mxu0 0
    %770 = vmatpush.bf16.msra.mxu0 0
    %771 = vmatpush.bf16.msra.mxu0 0
    %772 = vmatpush.bf16.msra.mxu0 0
    %773 = vmatpush.bf16.msra.mxu0 %v158
    %774 = vmatpush.bf16.msra.mxu0 %v156
    %775 = vmatpush.bf16.msra.mxu0 %v154
    %776 = vmatpush.bf16.msra.mxu0 %v152
    %777 = vmatmul.bf16.gmra.mxu0 %v767
    %v778 = vpop.f32.mrf.mxu0
    %v779 = vadd.f32 0.0, %v778
    %v780 = vpop.f32.mrf.mxu0
    %781 = vdwg.mxu0
    %782 = vmatpush.bf16.msra.mxu0 0
    %783 = vmatpush.bf16.msra.mxu0 0
    %784 = vmatpush.bf16.msra.mxu0 0
    %785 = vmatpush.bf16.msra.mxu0 0
    %786 = vmatpush.bf16.msra.mxu0 %v159
    %787 = vmatpush.bf16.msra.mxu0 %v157
    %788 = vmatpush.bf16.msra.mxu0 %v155
    %789 = vmatpush.bf16.msra.mxu0 %v153
    %790 = vmatmul.bf16.gmra.mxu0 %v767
    %v791 = vpop.f32.mrf.mxu0
    %v792 = vadd.f32 0.0, %v791
    %v793 = vpop.f32.mrf.mxu0
    %794 = vdwg.mxu0
    %v797 = vrot.slane %v779, 4
    %v798 = vrot.slane %v792, 4
    %v801 = vadd.f32 %v759, %v797
    %v802 = vadd.f32 %v760, %v798
    %v803 = vxor.u32 %v801, 2147483648
    %v804 = vxor.u32 %v802, 2147483648
    %v805 = vmul.f32 %v803, 1.442695
    %v806 = vpow.pop %v805
    %v807 = vmul.f32 %v804, 1.442695
    %v808 = vpow.pop %v807
    %v809 = vadd.f32 %v806, 1.0
    %v810 = vadd.f32 %v808, 1.0
    %v811 = vrcp.pop %v809
    %v812 = vmul.f32 %v809, %v811
    %v813 = vsub.f32 1.0, %v812
    %v814 = vmul.f32 %v811, %v813
    %v815 = vadd.f32 %v811, %v814
    %vm816 = vweird.f32 %v809
    %vm817 = vweird.f32 %v811
    %vm818 = vmor %vm816, %vm817
    %v819 = vsel %vm818, %v811, %v815
    %v820 = vand.u32 2147483647, %v809
    %vm821 = vcmp.eq.f32.partialorder %v820, 8.507059e+37
    %v822 = vand.u32 %v809, 2147483648
    %v823 = vor.u32 1.1754944e-38, %v822
    %v824 = vsel %vm821, %v823, %v819
    %v825 = vmul.f32 1.0, %v824
    %v826 = vrcp.pop %v810
    %v827 = vmul.f32 %v810, %v826
    %v828 = vsub.f32 1.0, %v827
    %v829 = vmul.f32 %v826, %v828
    %v830 = vadd.f32 %v826, %v829
    %vm831 = vweird.f32 %v810
    %vm832 = vweird.f32 %v826
    %vm833 = vmor %vm831, %vm832
    %v834 = vsel %vm833, %v826, %v830
    %v835 = vand.u32 2147483647, %v810
    %vm836 = vcmp.eq.f32.partialorder %v835, 8.507059e+37
    %v837 = vand.u32 %v810, 2147483648
    %v838 = vor.u32 1.1754944e-38, %v837
    %v839 = vsel %vm836, %v838, %v834
    %v840 = vmul.f32 1.0, %v839
    %v841 = vtanh.pop %v802
    %v843 = vrot.slane %v750, 6
    %v845 = vmul.f32 %v825, %v843
    %v846 = vmul.f32 %v825, %v841
    %848 = vrot.lane.b32.xlu0 %v846, 64
    %v849 = vpop.permute.xlu0 %848
    %v851 = vadd.f32 %v845, %v849
    %v852 = vtanh.pop %v851
    %v853 = vmul.f32 %v840, %v852
    %855 = vrot.lane.b32.xlu0 %v853, 64
    %v856 = vpop.permute.xlu0 %855
    %858 = vst.msk [vmem:[#allocation3 + $0x8] sm:$0x30] %vm457, %v856
    %859 = vst.msk [vmem:[#allocation3 + $0xe] sm:$0x30] %vm459, %v856
    %v860 = vld [vmem:[#allocation2 + $0x10] sm:$0xc0]
    %v861 = vld [vmem:[#allocation2 + $0x18] sm:$0xc0]
    %v862 = vpack.c.bf16 %v853, %v853
    %v864 = vrot.slane %v862, 2
    %865 = vrot.lane.b32.xlu0 %v864, 64
    %v866 = vpop.permute.xlu0 %865
    %v868 = vsel %vm168, %v866, 0
    %870 = vmatpush.bf16.msra.mxu0 0
    %871 = vmatpush.bf16.msra.mxu0 0
    %872 = vmatpush.bf16.msra.mxu0 0
    %873 = vmatpush.bf16.msra.mxu0 0
    %874 = vmatpush.bf16.msra.mxu0 %v158
    %875 = vmatpush.bf16.msra.mxu0 %v156
    %876 = vmatpush.bf16.msra.mxu0 %v154
    %877 = vmatpush.bf16.msra.mxu0 %v152
    %878 = vmatmul.bf16.gmra.mxu0 %v868
    %v879 = vpop.f32.mrf.mxu0
    %v880 = vadd.f32 0.0, %v879
    %v881 = vpop.f32.mrf.mxu0
    %882 = vdwg.mxu0
    %883 = vmatpush.bf16.msra.mxu0 0
    %884 = vmatpush.bf16.msra.mxu0 0
    %885 = vmatpush.bf16.msra.mxu0 0
    %886 = vmatpush.bf16.msra.mxu0 0
    %887 = vmatpush.bf16.msra.mxu0 %v159
    %888 = vmatpush.bf16.msra.mxu0 %v157
    %889 = vmatpush.bf16.msra.mxu0 %v155
    %890 = vmatpush.bf16.msra.mxu0 %v153
    %891 = vmatmul.bf16.gmra.mxu0 %v868
    %v892 = vpop.f32.mrf.mxu0
    %v893 = vadd.f32 0.0, %v892
    %v894 = vpop.f32.mrf.mxu0
    %895 = vdwg.mxu0
    %v898 = vrot.slane %v880, 2
    %v899 = vrot.slane %v893, 2
    %v902 = vadd.f32 %v860, %v898
    %v903 = vadd.f32 %v861, %v899
    %v904 = vxor.u32 %v902, 2147483648
    %v905 = vxor.u32 %v903, 2147483648
    %v906 = vmul.f32 %v904, 1.442695
    %v907 = vpow.pop %v906
    %v908 = vmul.f32 %v905, 1.442695
    %v909 = vpow.pop %v908
    %v910 = vadd.f32 %v907, 1.0
    %v911 = vadd.f32 %v909, 1.0
    %v912 = vrcp.pop %v910
    %v913 = vmul.f32 %v910, %v912
    %v914 = vsub.f32 1.0, %v913
    %v915 = vmul.f32 %v912, %v914
    %v916 = vadd.f32 %v912, %v915
    %vm917 = vweird.f32 %v910
    %vm918 = vweird.f32 %v912
    %vm919 = vmor %vm917, %vm918
    %v920 = vsel %vm919, %v912, %v916
    %v921 = vand.u32 2147483647, %v910
    %vm922 = vcmp.eq.f32.partialorder %v921, 8.507059e+37
    %v923 = vand.u32 %v910, 2147483648
    %v924 = vor.u32 1.1754944e-38, %v923
    %v925 = vsel %vm922, %v924, %v920
    %v926 = vmul.f32 1.0, %v925
    %v927 = vrcp.pop %v911
    %v928 = vmul.f32 %v911, %v927
    %v929 = vsub.f32 1.0, %v928
    %v930 = vmul.f32 %v927, %v929
    %v931 = vadd.f32 %v927, %v930
    %vm932 = vweird.f32 %v911
    %vm933 = vweird.f32 %v927
    %vm934 = vmor %vm932, %vm933
    %v935 = vsel %vm934, %v927, %v931
    %v936 = vand.u32 2147483647, %v911
    %vm937 = vcmp.eq.f32.partialorder %v936, 8.507059e+37
    %v938 = vand.u32 %v911, 2147483648
    %v939 = vor.u32 1.1754944e-38, %v938
    %v940 = vsel %vm937, %v939, %v935
    %v941 = vmul.f32 1.0, %v940
    %v942 = vtanh.pop %v903
    %v944 = vrot.slane %v851, 6
    %v946 = vmul.f32 %v926, %v944
    %v947 = vmul.f32 %v926, %v942
    %949 = vrot.lane.b32.xlu0 %v947, 64
    %v950 = vpop.permute.xlu0 %949
    %v952 = vadd.f32 %v946, %v950
    %v953 = vtanh.pop %v952
    %v954 = vmul.f32 %v941, %v953
    %956 = vrot.lane.b32.xlu0 %v954, 64
    %v957 = vpop.permute.xlu0 %956
    %959 = vst.msk [vmem:[#allocation3 + $0x8] sm:$0xc0] %vm560, %v957
    %960 = vst.msk [vmem:[#allocation3 + $0xa] sm:$0xc0] %vm562, %v957
    %v961 = vld [vmem:[#allocation2 + $0x20] sm:$0x3]
    %v962 = vld [vmem:[#allocation2 + $0x28] sm:$0x3]
    %v963 = vpack.c.bf16 %v954, %v954
    %v965 = vrot.slane %v963, 3
    %966 = vrot.lane.b32.xlu0 %v965, 64
    %v967 = vpop.permute.xlu0 %966
    %v969 = vsel %vm168, %v967, 0
    %971 = vmatpush.bf16.msra.mxu0 0
    %972 = vmatpush.bf16.msra.mxu0 0
    %973 = vmatpush.bf16.msra.mxu0 0
    %974 = vmatpush.bf16.msra.mxu0 0
    %975 = vmatpush.bf16.msra.mxu0 %v158
    %976 = vmatpush.bf16.msra.mxu0 %v156
    %977 = vmatpush.bf16.msra.mxu0 %v154
    %978 = vmatpush.bf16.msra.mxu0 %v152
    %979 = vmatmul.bf16.gmra.mxu0 %v969
    %v980 = vpop.f32.mrf.mxu0
    %v981 = vadd.f32 0.0, %v980
    %v982 = vpop.f32.mrf.mxu0
    %983 = vdwg.mxu0
    %984 = vmatpush.bf16.msra.mxu0 0
    %985 = vmatpush.bf16.msra.mxu0 0
    %986 = vmatpush.bf16.msra.mxu0 0
    %987 = vmatpush.bf16.msra.mxu0 0
    %988 = vmatpush.bf16.msra.mxu0 %v159
    %989 = vmatpush.bf16.msra.mxu0 %v157
    %990 = vmatpush.bf16.msra.mxu0 %v155
    %991 = vmatpush.bf16.msra.mxu0 %v153
    %992 = vmatmul.bf16.gmra.mxu0 %v969
    %v993 = vpop.f32.mrf.mxu0
    %v994 = vadd.f32 0.0, %v993
    %v995 = vpop.f32.mrf.mxu0
    %996 = vdwg.mxu0
    %v997 = vadd.f32 %v961, %v981
    %v998 = vadd.f32 %v962, %v994
    %v999 = vxor.u32 %v997, 2147483648
    %v1000 = vxor.u32 %v998, 2147483648
    %v1001 = vmul.f32 %v999, 1.442695
    %v1002 = vpow.pop %v1001
    %v1003 = vmul.f32 %v1000, 1.442695
    %v1004 = vpow.pop %v1003
    %v1005 = vadd.f32 %v1002, 1.0
    %v1006 = vadd.f32 %v1004, 1.0
    %v1007 = vrcp.pop %v1005
    %v1008 = vmul.f32 %v1005, %v1007
    %v1009 = vsub.f32 1.0, %v1008
    %v1010 = vmul.f32 %v1007, %v1009
    %v1011 = vadd.f32 %v1007, %v1010
    %vm1012 = vweird.f32 %v1005
    %vm1013 = vweird.f32 %v1007
    %vm1014 = vmor %vm1012, %vm1013
    %v1015 = vsel %vm1014, %v1007, %v1011
    %v1016 = vand.u32 2147483647, %v1005
    %vm1017 = vcmp.eq.f32.partialorder %v1016, 8.507059e+37
    %v1018 = vand.u32 %v1005, 2147483648
    %v1019 = vor.u32 1.1754944e-38, %v1018
    %v1020 = vsel %vm1017, %v1019, %v1015
    %v1021 = vmul.f32 1.0, %v1020
    %v1022 = vrcp.pop %v1006
    %v1023 = vmul.f32 %v1006, %v1022
    %v1024 = vsub.f32 1.0, %v1023
    %v1025 = vmul.f32 %v1022, %v1024
    %v1026 = vadd.f32 %v1022, %v1025
    %vm1027 = vweird.f32 %v1006
    %vm1028 = vweird.f32 %v1022
    %vm1029 = vmor %vm1027, %vm1028
    %v1030 = vsel %vm1029, %v1022, %v1026
    %v1031 = vand.u32 2147483647, %v1006
    %vm1032 = vcmp.eq.f32.partialorder %v1031, 8.507059e+37
    %v1033 = vand.u32 %v1006, 2147483648
    %v1034 = vor.u32 1.1754944e-38, %v1033
    %v1035 = vsel %vm1032, %v1034, %v1030
    %v1036 = vmul.f32 1.0, %v1035
    %v1037 = vtanh.pop %v998
    %v1039 = vrot.slane %v952, 6
    %v1041 = vmul.f32 %v1021, %v1039
    %v1042 = vmul.f32 %v1021, %v1037
    %1044 = vrot.lane.b32.xlu0 %v1042, 64
    %v1045 = vpop.permute.xlu0 %1044
    %v1047 = vadd.f32 %v1041, %v1045
    %v1048 = vtanh.pop %v1047
    %v1049 = vmul.f32 %v1036, %v1048
    %1051 = vrot.lane.b32.xlu0 %v1049, 64
    %v1052 = vpop.permute.xlu0 %1051
    %1054 = vst.msk [vmem:[#allocation3 + $0x10] sm:$0x3] %vm252, %v1052
    %1055 = vst.msk [vmem:[#allocation3 + $0xe] sm:$0x3] %vm254, %v1052
    %v1056 = vld [vmem:[#allocation2 + $0x20] sm:$0xc]
    %v1057 = vld [vmem:[#allocation2 + $0x28] sm:$0xc]
    %v1058 = vpack.c.bf16 %v1049, %v1049
    %1060 = vrot.lane.b32.xlu0 %v1058, 64
    %v1061 = vpop.permute.xlu0 %1060
    %v1063 = vsel %vm168, %v1061, 0
    %1065 = vmatpush.bf16.msra.mxu0 0
    %1066 = vmatpush.bf16.msra.mxu0 0
    %1067 = vmatpush.bf16.msra.mxu0 0
    %1068 = vmatpush.bf16.msra.mxu0 0
    %1069 = vmatpush.bf16.msra.mxu0 %v158
    %1070 = vmatpush.bf16.msra.mxu0 %v156
    %1071 = vmatpush.bf16.msra.mxu0 %v154
    %1072 = vmatpush.bf16.msra.mxu0 %v152
    %1073 = vmatmul.bf16.gmra.mxu0 %v1063
    %v1074 = vpop.f32.mrf.mxu0
    %v1075 = vadd.f32 0.0, %v1074
    %v1076 = vpop.f32.mrf.mxu0
    %1077 = vdwg.mxu0
    %1078 = vmatpush.bf16.msra.mxu0 0
    %1079 = vmatpush.bf16.msra.mxu0 0
    %1080 = vmatpush.bf16.msra.mxu0 0
    %1081 = vmatpush.bf16.msra.mxu0 0
    %1082 = vmatpush.bf16.msra.mxu0 %v159
    %1083 = vmatpush.bf16.msra.mxu0 %v157
    %1084 = vmatpush.bf16.msra.mxu0 %v155
    %1085 = vmatpush.bf16.msra.mxu0 %v153
    %1086 = vmatmul.bf16.gmra.mxu0 %v1063
    %v1087 = vpop.f32.mrf.mxu0
    %v1088 = vadd.f32 0.0, %v1087
    %v1089 = vpop.f32.mrf.mxu0
    %1090 = vdwg.mxu0
    %v1093 = vrot.slane %v1075, 6
    %v1094 = vrot.slane %v1088, 6
    %v1097 = vadd.f32 %v1056, %v1093
    %v1098 = vadd.f32 %v1057, %v1094
    %v1099 = vxor.u32 %v1097, 2147483648
    %v1100 = vxor.u32 %v1098, 2147483648
    %v1101 = vmul.f32 %v1099, 1.442695
    %v1102 = vpow.pop %v1101
    %v1103 = vmul.f32 %v1100, 1.442695
    %v1104 = vpow.pop %v1103
    %v1105 = vadd.f32 %v1102, 1.0
    %v1106 = vadd.f32 %v1104, 1.0
    %v1107 = vrcp.pop %v1105
    %v1108 = vmul.f32 %v1105, %v1107
    %v1109 = vsub.f32 1.0, %v1108
    %v1110 = vmul.f32 %v1107, %v1109
    %v1111 = vadd.f32 %v1107, %v1110
    %vm1112 = vweird.f32 %v1105
    %vm1113 = vweird.f32 %v1107
    %vm1114 = vmor %vm1112, %vm1113
    %v1115 = vsel %vm1114, %v1107, %v1111
    %v1116 = vand.u32 2147483647, %v1105
    %vm1117 = vcmp.eq.f32.partialorder %v1116, 8.507059e+37
    %v1118 = vand.u32 %v1105, 2147483648
    %v1119 = vor.u32 1.1754944e-38, %v1118
    %v1120 = vsel %vm1117, %v1119, %v1115
    %v1121 = vmul.f32 1.0, %v1120
    %v1122 = vrcp.pop %v1106
    %v1123 = vmul.f32 %v1106, %v1122
    %v1124 = vsub.f32 1.0, %v1123
    %v1125 = vmul.f32 %v1122, %v1124
    %v1126 = vadd.f32 %v1122, %v1125
    %vm1127 = vweird.f32 %v1106
    %vm1128 = vweird.f32 %v1122
    %vm1129 = vmor %vm1127, %vm1128
    %v1130 = vsel %vm1129, %v1122, %v1126
    %v1131 = vand.u32 2147483647, %v1106
    %vm1132 = vcmp.eq.f32.partialorder %v1131, 8.507059e+37
    %v1133 = vand.u32 %v1106, 2147483648
    %v1134 = vor.u32 1.1754944e-38, %v1133
    %v1135 = vsel %vm1132, %v1134, %v1130
    %v1136 = vmul.f32 1.0, %v1135
    %v1137 = vtanh.pop %v1098
    %v1139 = vrot.slane %v1047, 6
    %v1141 = vmul.f32 %v1121, %v1139
    %v1142 = vmul.f32 %v1121, %v1137
    %1144 = vrot.lane.b32.xlu0 %v1142, 64
    %v1145 = vpop.permute.xlu0 %1144
    %v1147 = vadd.f32 %v1141, %v1145
    %v1148 = vtanh.pop %v1147
    %v1149 = vmul.f32 %v1136, %v1148
    %1151 = vrot.lane.b32.xlu0 %v1149, 64
    %v1152 = vpop.permute.xlu0 %1151
    %1154 = vst.msk [vmem:[#allocation3 + $0x10] sm:$0xc] %vm354, %v1152
    %1155 = vst.msk [vmem:[#allocation3 + $0xa] sm:$0xc] %vm356, %v1152
    %v1156 = vld [vmem:[#allocation2 + $0x20] sm:$0x30]
    %v1157 = vld [vmem:[#allocation2 + $0x28] sm:$0x30]
    %v1158 = vpack.c.bf16 %v1149, %v1149
    %v1160 = vrot.slane %v1158, 1
    %1161 = vrot.lane.b32.xlu0 %v1160, 64
    %v1162 = vpop.permute.xlu0 %1161
    %v1164 = vsel %vm168, %v1162, 0
    %1166 = vmatpush.bf16.msra.mxu0 0
    %1167 = vmatpush.bf16.msra.mxu0 0
    %1168 = vmatpush.bf16.msra.mxu0 0
    %1169 = vmatpush.bf16.msra.mxu0 0
    %1170 = vmatpush.bf16.msra.mxu0 %v158
    %1171 = vmatpush.bf16.msra.mxu0 %v156
    %1172 = vmatpush.bf16.msra.mxu0 %v154
    %1173 = vmatpush.bf16.msra.mxu0 %v152
    %1174 = vmatmul.bf16.gmra.mxu0 %v1164
    %v1175 = vpop.f32.mrf.mxu0
    %v1176 = vadd.f32 0.0, %v1175
    %v1177 = vpop.f32.mrf.mxu0
    %1178 = vdwg.mxu0
    %1179 = vmatpush.bf16.msra.mxu0 0
    %1180 = vmatpush.bf16.msra.mxu0 0
    %1181 = vmatpush.bf16.msra.mxu0 0
    %1182 = vmatpush.bf16.msra.mxu0 0
    %1183 = vmatpush.bf16.msra.mxu0 %v159
    %1184 = vmatpush.bf16.msra.mxu0 %v157
    %1185 = vmatpush.bf16.msra.mxu0 %v155
    %1186 = vmatpush.bf16.msra.mxu0 %v153
    %1187 = vmatmul.bf16.gmra.mxu0 %v1164
    %v1188 = vpop.f32.mrf.mxu0
    %v1189 = vadd.f32 0.0, %v1188
    %v1190 = vpop.f32.mrf.mxu0
    %1191 = vdwg.mxu0
    %v1194 = vrot.slane %v1176, 4
    %v1195 = vrot.slane %v1189, 4
    %v1198 = vadd.f32 %v1156, %v1194
    %v1199 = vadd.f32 %v1157, %v1195
    %v1200 = vxor.u32 %v1198, 2147483648
    %v1201 = vxor.u32 %v1199, 2147483648
    %v1202 = vmul.f32 %v1200, 1.442695
    %v1203 = vpow.pop %v1202
    %v1204 = vmul.f32 %v1201, 1.442695
    %v1205 = vpow.pop %v1204
    %v1206 = vadd.f32 %v1203, 1.0
    %v1207 = vadd.f32 %v1205, 1.0
    %v1208 = vrcp.pop %v1206
    %v1209 = vmul.f32 %v1206, %v1208
    %v1210 = vsub.f32 1.0, %v1209
    %v1211 = vmul.f32 %v1208, %v1210
    %v1212 = vadd.f32 %v1208, %v1211
    %vm1213 = vweird.f32 %v1206
    %vm1214 = vweird.f32 %v1208
    %vm1215 = vmor %vm1213, %vm1214
    %v1216 = vsel %vm1215, %v1208, %v1212
    %v1217 = vand.u32 2147483647, %v1206
    %vm1218 = vcmp.eq.f32.partialorder %v1217, 8.507059e+37
    %v1219 = vand.u32 %v1206, 2147483648
    %v1220 = vor.u32 1.1754944e-38, %v1219
    %v1221 = vsel %vm1218, %v1220, %v1216
    %v1222 = vmul.f32 1.0, %v1221
    %v1223 = vrcp.pop %v1207
    %v1224 = vmul.f32 %v1207, %v1223
    %v1225 = vsub.f32 1.0, %v1224
    %v1226 = vmul.f32 %v1223, %v1225
    %v1227 = vadd.f32 %v1223, %v1226
    %vm1228 = vweird.f32 %v1207
    %vm1229 = vweird.f32 %v1223
    %vm1230 = vmor %vm1228, %vm1229
    %v1231 = vsel %vm1230, %v1223, %v1227
    %v1232 = vand.u32 2147483647, %v1207
    %vm1233 = vcmp.eq.f32.partialorder %v1232, 8.507059e+37
    %v1234 = vand.u32 %v1207, 2147483648
    %v1235 = vor.u32 1.1754944e-38, %v1234
    %v1236 = vsel %vm1233, %v1235, %v1231
    %v1237 = vmul.f32 1.0, %v1236
    %v1238 = vtanh.pop %v1199
    %v1240 = vrot.slane %v1147, 6
    %v1242 = vmul.f32 %v1222, %v1240
    %v1243 = vmul.f32 %v1222, %v1238
    %1245 = vrot.lane.b32.xlu0 %v1243, 64
    %v1246 = vpop.permute.xlu0 %1245
    %v1248 = vadd.f32 %v1242, %v1246
    %v1249 = vtanh.pop %v1248
    %v1250 = vmul.f32 %v1237, %v1249
    %1252 = vrot.lane.b32.xlu0 %v1250, 64
    %v1253 = vpop.permute.xlu0 %1252
    %1255 = vst.msk [vmem:[#allocation3 + $0x10] sm:$0x30] %vm457, %v1253
    %1256 = vst.msk [vmem:[#allocation3 + $0x6] sm:$0x30] %vm459, %v1253
    %v1257 = vld [vmem:[#allocation2 + $0x20] sm:$0xc0]
    %v1258 = vld [vmem:[#allocation2 + $0x28] sm:$0xc0]
    %v1259 = vpack.c.bf16 %v1250, %v1250
    %v1261 = vrot.slane %v1259, 2
    %1262 = vrot.lane.b32.xlu0 %v1261, 64
    %v1263 = vpop.permute.xlu0 %1262
    %v1265 = vsel %vm168, %v1263, 0
    %1267 = vmatpush.bf16.msra.mxu0 0
    %1268 = vmatpush.bf16.msra.mxu0 0
    %1269 = vmatpush.bf16.msra.mxu0 0
    %1270 = vmatpush.bf16.msra.mxu0 0
    %1271 = vmatpush.bf16.msra.mxu0 %v158
    %1272 = vmatpush.bf16.msra.mxu0 %v156
    %1273 = vmatpush.bf16.msra.mxu0 %v154
    %1274 = vmatpush.bf16.msra.mxu0 %v152
    %1275 = vmatmul.bf16.gmra.mxu0 %v1265
    %v1276 = vpop.f32.mrf.mxu0
    %v1277 = vadd.f32 0.0, %v1276
    %v1278 = vpop.f32.mrf.mxu0
    %1279 = vdwg.mxu0
    %1280 = vmatpush.bf16.msra.mxu0 0
    %1281 = vmatpush.bf16.msra.mxu0 0
    %1282 = vmatpush.bf16.msra.mxu0 0
    %1283 = vmatpush.bf16.msra.mxu0 0
    %1284 = vmatpush.bf16.msra.mxu0 %v159
    %1285 = vmatpush.bf16.msra.mxu0 %v157
    %1286 = vmatpush.bf16.msra.mxu0 %v155
    %1287 = vmatpush.bf16.msra.mxu0 %v153
    %1288 = vmatmul.bf16.gmra.mxu0 %v1265
    %v1289 = vpop.f32.mrf.mxu0
    %v1290 = vadd.f32 0.0, %v1289
    %v1291 = vpop.f32.mrf.mxu0
    %1292 = vdwg.mxu0
    %v1295 = vrot.slane %v1277, 2
    %v1296 = vrot.slane %v1290, 2
    %v1299 = vadd.f32 %v1257, %v1295
    %v1300 = vadd.f32 %v1258, %v1296
    %v1301 = vxor.u32 %v1299, 2147483648
    %v1302 = vxor.u32 %v1300, 2147483648
    %v1303 = vmul.f32 %v1301, 1.442695
    %v1304 = vpow.pop %v1303
    %v1305 = vmul.f32 %v1302, 1.442695
    %v1306 = vpow.pop %v1305
    %v1307 = vadd.f32 %v1304, 1.0
    %v1308 = vadd.f32 %v1306, 1.0
    %v1309 = vrcp.pop %v1307
    %v1310 = vmul.f32 %v1307, %v1309
    %v1311 = vsub.f32 1.0, %v1310
    %v1312 = vmul.f32 %v1309, %v1311
    %v1313 = vadd.f32 %v1309, %v1312
    %vm1314 = vweird.f32 %v1307
    %vm1315 = vweird.f32 %v1309
    %vm1316 = vmor %vm1314, %vm1315
    %v1317 = vsel %vm1316, %v1309, %v1313
    %v1318 = vand.u32 2147483647, %v1307
    %vm1319 = vcmp.eq.f32.partialorder %v1318, 8.507059e+37
    %v1320 = vand.u32 %v1307, 2147483648
    %v1321 = vor.u32 1.1754944e-38, %v1320
    %v1322 = vsel %vm1319, %v1321, %v1317
    %v1323 = vmul.f32 1.0, %v1322
    %v1324 = vrcp.pop %v1308
    %v1325 = vmul.f32 %v1308, %v1324
    %v1326 = vsub.f32 1.0, %v1325
    %v1327 = vmul.f32 %v1324, %v1326
    %v1328 = vadd.f32 %v1324, %v1327
    %vm1329 = vweird.f32 %v1308
    %vm1330 = vweird.f32 %v1324
    %vm1331 = vmor %vm1329, %vm1330
    %v1332 = vsel %vm1331, %v1324, %v1328
    %v1333 = vand.u32 2147483647, %v1308
    %vm1334 = vcmp.eq.f32.partialorder %v1333, 8.507059e+37
    %v1335 = vand.u32 %v1308, 2147483648
    %v1336 = vor.u32 1.1754944e-38, %v1335
    %v1337 = vsel %vm1334, %v1336, %v1332
    %v1338 = vmul.f32 1.0, %v1337
    %v1339 = vtanh.pop %v1300
    %v1341 = vrot.slane %v1248, 6
    %v1343 = vmul.f32 %v1323, %v1341
    %v1344 = vmul.f32 %v1323, %v1339
    %1346 = vrot.lane.b32.xlu0 %v1344, 64
    %v1347 = vpop.permute.xlu0 %1346
    %v1349 = vadd.f32 %v1343, %v1347
    %v1350 = vtanh.pop %v1349
    %v1351 = vmul.f32 %v1338, %v1350
    %1353 = vrot.lane.b32.xlu0 %v1351, 64
    %v1354 = vpop.permute.xlu0 %1353
    %1356 = vst.msk [vmem:[#allocation3 + $0x10] sm:$0xc0] %vm560, %v1354
    %1357 = vst.msk [vmem:[#allocation3 + $0x2] sm:$0xc0] %vm562, %v1354
    %v1358 = vld [vmem:[#allocation2 + $0x30] sm:$0x3]
    %v1359 = vld [vmem:[#allocation2 + $0x38] sm:$0x3]
    %v1360 = vpack.c.bf16 %v1351, %v1351
    %v1362 = vrot.slane %v1360, 3
    %1363 = vrot.lane.b32.xlu0 %v1362, 64
    %v1364 = vpop.permute.xlu0 %1363
    %v1366 = vsel %vm168, %v1364, 0
    %1368 = vmatpush.bf16.msra.mxu0 0
    %1369 = vmatpush.bf16.msra.mxu0 0
    %1370 = vmatpush.bf16.msra.mxu0 0
    %1371 = vmatpush.bf16.msra.mxu0 0
    %1372 = vmatpush.bf16.msra.mxu0 %v158
    %1373 = vmatpush.bf16.msra.mxu0 %v156
    %1374 = vmatpush.bf16.msra.mxu0 %v154
    %1375 = vmatpush.bf16.msra.mxu0 %v152
    %1376 = vmatmul.bf16.gmra.mxu0 %v1366
    %v1377 = vpop.f32.mrf.mxu0
    %v1378 = vadd.f32 0.0, %v1377
    %v1379 = vpop.f32.mrf.mxu0
    %1380 = vdwg.mxu0
    %1381 = vmatpush.bf16.msra.mxu0 0
    %1382 = vmatpush.bf16.msra.mxu0 0
    %1383 = vmatpush.bf16.msra.mxu0 0
    %1384 = vmatpush.bf16.msra.mxu0 0
    %1385 = vmatpush.bf16.msra.mxu0 %v159
    %1386 = vmatpush.bf16.msra.mxu0 %v157
    %1387 = vmatpush.bf16.msra.mxu0 %v155
    %1388 = vmatpush.bf16.msra.mxu0 %v153
    %1389 = vmatmul.bf16.gmra.mxu0 %v1366
    %v1390 = vpop.f32.mrf.mxu0
    %v1391 = vadd.f32 0.0, %v1390
    %v1392 = vpop.f32.mrf.mxu0
    %1393 = vdwg.mxu0
    %v1394 = vadd.f32 %v1358, %v1378
    %v1395 = vadd.f32 %v1359, %v1391
    %v1396 = vxor.u32 %v1394, 2147483648
    %v1397 = vxor.u32 %v1395, 2147483648
    %v1398 = vmul.f32 %v1396, 1.442695
    %v1399 = vpow.pop %v1398
    %v1400 = vmul.f32 %v1397, 1.442695
    %v1401 = vpow.pop %v1400
    %v1402 = vadd.f32 %v1399, 1.0
    %v1403 = vadd.f32 %v1401, 1.0
    %v1404 = vrcp.pop %v1402
    %v1405 = vmul.f32 %v1402, %v1404
    %v1406 = vsub.f32 1.0, %v1405
    %v1407 = vmul.f32 %v1404, %v1406
    %v1408 = vadd.f32 %v1404, %v1407
    %vm1409 = vweird.f32 %v1402
    %vm1410 = vweird.f32 %v1404
    %vm1411 = vmor %vm1409, %vm1410
    %v1412 = vsel %vm1411, %v1404, %v1408
    %v1413 = vand.u32 2147483647, %v1402
    %vm1414 = vcmp.eq.f32.partialorder %v1413, 8.507059e+37
    %v1415 = vand.u32 %v1402, 2147483648
    %v1416 = vor.u32 1.1754944e-38, %v1415
    %v1417 = vsel %vm1414, %v1416, %v1412
    %v1418 = vmul.f32 1.0, %v1417
    %v1419 = vrcp.pop %v1403
    %v1420 = vmul.f32 %v1403, %v1419
    %v1421 = vsub.f32 1.0, %v1420
    %v1422 = vmul.f32 %v1419, %v1421
    %v1423 = vadd.f32 %v1419, %v1422
    %vm1424 = vweird.f32 %v1403
    %vm1425 = vweird.f32 %v1419
    %vm1426 = vmor %vm1424, %vm1425
    %v1427 = vsel %vm1426, %v1419, %v1423
    %v1428 = vand.u32 2147483647, %v1403
    %vm1429 = vcmp.eq.f32.partialorder %v1428, 8.507059e+37
    %v1430 = vand.u32 %v1403, 2147483648
    %v1431 = vor.u32 1.1754944e-38, %v1430
    %v1432 = vsel %vm1429, %v1431, %v1427
    %v1433 = vmul.f32 1.0, %v1432
    %v1434 = vtanh.pop %v1395
    %v1436 = vrot.slane %v1349, 6
    %v1438 = vmul.f32 %v1418, %v1436
    %v1439 = vmul.f32 %v1418, %v1434
    %1441 = vrot.lane.b32.xlu0 %v1439, 64
    %v1442 = vpop.permute.xlu0 %1441
    %v1444 = vadd.f32 %v1438, %v1442
    %v1445 = vtanh.pop %v1444
    %v1446 = vmul.f32 %v1433, %v1445
    %1448 = vrot.lane.b32.xlu0 %v1446, 64
    %v1449 = vpop.permute.xlu0 %1448
    %1451 = vst.msk [vmem:[#allocation3 + $0x18] sm:$0x3] %vm252, %v1449
    %1452 = vst.msk [vmem:[#allocation3 + $0x6] sm:$0x3] %vm254, %v1449
    %v1453 = vld [vmem:[#allocation2 + $0x30] sm:$0xc]
    %v1454 = vld [vmem:[#allocation2 + $0x38] sm:$0xc]
    %v1455 = vpack.c.bf16 %v1446, %v1446
    %1457 = vrot.lane.b32.xlu0 %v1455, 64
    %v1458 = vpop.permute.xlu0 %1457
    %v1460 = vsel %vm168, %v1458, 0
    %1462 = vmatpush.bf16.msra.mxu0 0
    %1463 = vmatpush.bf16.msra.mxu0 0
    %1464 = vmatpush.bf16.msra.mxu0 0
    %1465 = vmatpush.bf16.msra.mxu0 0
    %1466 = vmatpush.bf16.msra.mxu0 %v158
    %1467 = vmatpush.bf16.msra.mxu0 %v156
    %1468 = vmatpush.bf16.msra.mxu0 %v154
    %1469 = vmatpush.bf16.msra.mxu0 %v152
    %1470 = vmatmul.bf16.gmra.mxu0 %v1460
    %v1471 = vpop.f32.mrf.mxu0
    %v1472 = vadd.f32 0.0, %v1471
    %v1473 = vpop.f32.mrf.mxu0
    %1474 = vdwg.mxu0
    %1475 = vmatpush.bf16.msra.mxu0 0
    %1476 = vmatpush.bf16.msra.mxu0 0
    %1477 = vmatpush.bf16.msra.mxu0 0
    %1478 = vmatpush.bf16.msra.mxu0 0
    %1479 = vmatpush.bf16.msra.mxu0 %v159
    %1480 = vmatpush.bf16.msra.mxu0 %v157
    %1481 = vmatpush.bf16.msra.mxu0 %v155
    %1482 = vmatpush.bf16.msra.mxu0 %v153
    %1483 = vmatmul.bf16.gmra.mxu0 %v1460
    %v1484 = vpop.f32.mrf.mxu0
    %v1485 = vadd.f32 0.0, %v1484
    %v1486 = vpop.f32.mrf.mxu0
    %1487 = vdwg.mxu0
    %v1490 = vrot.slane %v1472, 6
    %v1491 = vrot.slane %v1485, 6
    %v1494 = vadd.f32 %v1453, %v1490
    %v1495 = vadd.f32 %v1454, %v1491
    %v1496 = vxor.u32 %v1494, 2147483648
    %v1497 = vxor.u32 %v1495, 2147483648
    %v1498 = vmul.f32 %v1496, 1.442695
    %v1499 = vpow.pop %v1498
    %v1500 = vmul.f32 %v1497, 1.442695
    %v1501 = vpow.pop %v1500
    %v1502 = vadd.f32 %v1499, 1.0
    %v1503 = vadd.f32 %v1501, 1.0
    %v1504 = vrcp.pop %v1502
    %v1505 = vmul.f32 %v1502, %v1504
    %v1506 = vsub.f32 1.0, %v1505
    %v1507 = vmul.f32 %v1504, %v1506
    %v1508 = vadd.f32 %v1504, %v1507
    %vm1509 = vweird.f32 %v1502
    %vm1510 = vweird.f32 %v1504
    %vm1511 = vmor %vm1509, %vm1510
    %v1512 = vsel %vm1511, %v1504, %v1508
    %v1513 = vand.u32 2147483647, %v1502
    %vm1514 = vcmp.eq.f32.partialorder %v1513, 8.507059e+37
    %v1515 = vand.u32 %v1502, 2147483648
    %v1516 = vor.u32 1.1754944e-38, %v1515
    %v1517 = vsel %vm1514, %v1516, %v1512
    %v1518 = vmul.f32 1.0, %v1517
    %v1519 = vrcp.pop %v1503
    %v1520 = vmul.f32 %v1503, %v1519
    %v1521 = vsub.f32 1.0, %v1520
    %v1522 = vmul.f32 %v1519, %v1521
    %v1523 = vadd.f32 %v1519, %v1522
    %vm1524 = vweird.f32 %v1503
    %vm1525 = vweird.f32 %v1519
    %vm1526 = vmor %vm1524, %vm1525
    %v1527 = vsel %vm1526, %v1519, %v1523
    %v1528 = vand.u32 2147483647, %v1503
    %vm1529 = vcmp.eq.f32.partialorder %v1528, 8.507059e+37
    %v1530 = vand.u32 %v1503, 2147483648
    %v1531 = vor.u32 1.1754944e-38, %v1530
    %v1532 = vsel %vm1529, %v1531, %v1527
    %v1533 = vmul.f32 1.0, %v1532
    %v1534 = vtanh.pop %v1495
    %v1536 = vrot.slane %v1444, 6
    %v1538 = vmul.f32 %v1518, %v1536
    %v1539 = vmul.f32 %v1518, %v1534
    %1541 = vrot.lane.b32.xlu0 %v1539, 64
    %v1542 = vpop.permute.xlu0 %1541
    %v1544 = vadd.f32 %v1538, %v1542
    %v1545 = vtanh.pop %v1544
    %v1546 = vmul.f32 %v1533, %v1545
    %1548 = vrot.lane.b32.xlu0 %v1546, 64
    %v1549 = vpop.permute.xlu0 %1548
    %1551 = vst.msk [vmem:[#allocation3 + $0x18] sm:$0xc] %vm354, %v1549
    %1552 = vst.msk [vmem:[#allocation3 + $0x2] sm:$0xc] %vm356, %v1549
    %v1553 = vld [vmem:[#allocation2 + $0x30] sm:$0x30]
    %v1554 = vld [vmem:[#allocation2 + $0x38] sm:$0x30]
    %v1555 = vpack.c.bf16 %v1546, %v1546
    %v1557 = vrot.slane %v1555, 1
    %1558 = vrot.lane.b32.xlu0 %v1557, 64
    %v1559 = vpop.permute.xlu0 %1558
    %v1561 = vsel %vm168, %v1559, 0
    %1563 = vmatpush.bf16.msra.mxu0 0
    %1564 = vmatpush.bf16.msra.mxu0 0
    %1565 = vmatpush.bf16.msra.mxu0 0
    %1566 = vmatpush.bf16.msra.mxu0 0
    %1567 = vmatpush.bf16.msra.mxu0 %v158
    %1568 = vmatpush.bf16.msra.mxu0 %v156
    %1569 = vmatpush.bf16.msra.mxu0 %v154
    %1570 = vmatpush.bf16.msra.mxu0 %v152
    %1571 = vmatmul.bf16.gmra.mxu0 %v1561
    %v1572 = vpop.f32.mrf.mxu0
    %v1573 = vadd.f32 0.0, %v1572
    %v1574 = vpop.f32.mrf.mxu0
    %1575 = vdwg.mxu0
    %1576 = vmatpush.bf16.msra.mxu0 0
    %1577 = vmatpush.bf16.msra.mxu0 0
    %1578 = vmatpush.bf16.msra.mxu0 0
    %1579 = vmatpush.bf16.msra.mxu0 0
    %1580 = vmatpush.bf16.msra.mxu0 %v159
    %1581 = vmatpush.bf16.msra.mxu0 %v157
    %1582 = vmatpush.bf16.msra.mxu0 %v155
    %1583 = vmatpush.bf16.msra.mxu0 %v153
    %1584 = vmatmul.bf16.gmra.mxu0 %v1561
    %v1585 = vpop.f32.mrf.mxu0
    %v1586 = vadd.f32 0.0, %v1585
    %v1587 = vpop.f32.mrf.mxu0
    %1588 = vdwg.mxu0
    %v1591 = vrot.slane %v1573, 4
    %v1592 = vrot.slane %v1586, 4
    %v1595 = vadd.f32 %v1553, %v1591
    %v1596 = vadd.f32 %v1554, %v1592
    %v1597 = vxor.u32 %v1595, 2147483648
    %v1598 = vxor.u32 %v1596, 2147483648
    %v1599 = vmul.f32 %v1597, 1.442695
    %v1600 = vpow.pop %v1599
    %v1601 = vmul.f32 %v1598, 1.442695
    %v1602 = vpow.pop %v1601
    %v1603 = vadd.f32 %v1600, 1.0
    %v1604 = vadd.f32 %v1602, 1.0
    %v1605 = vrcp.pop %v1603
    %v1606 = vmul.f32 %v1603, %v1605
    %v1607 = vsub.f32 1.0, %v1606
    %v1608 = vmul.f32 %v1605, %v1607
    %v1609 = vadd.f32 %v1605, %v1608
    %vm1610 = vweird.f32 %v1603
    %vm1611 = vweird.f32 %v1605
    %vm1612 = vmor %vm1610, %vm1611
    %v1613 = vsel %vm1612, %v1605, %v1609
    %v1614 = vand.u32 2147483647, %v1603
    %vm1615 = vcmp.eq.f32.partialorder %v1614, 8.507059e+37
    %v1616 = vand.u32 %v1603, 2147483648
    %v1617 = vor.u32 1.1754944e-38, %v1616
    %v1618 = vsel %vm1615, %v1617, %v1613
    %v1619 = vmul.f32 1.0, %v1618
    %v1620 = vrcp.pop %v1604
    %v1621 = vmul.f32 %v1604, %v1620
    %v1622 = vsub.f32 1.0, %v1621
    %v1623 = vmul.f32 %v1620, %v1622
    %v1624 = vadd.f32 %v1620, %v1623
    %vm1625 = vweird.f32 %v1604
    %vm1626 = vweird.f32 %v1620
    %vm1627 = vmor %vm1625, %vm1626
    %v1628 = vsel %vm1627, %v1620, %v1624
    %v1629 = vand.u32 2147483647, %v1604
    %vm1630 = vcmp.eq.f32.partialorder %v1629, 8.507059e+37
    %v1631 = vand.u32 %v1604, 2147483648
    %v1632 = vor.u32 1.1754944e-38, %v1631
    %v1633 = vsel %vm1630, %v1632, %v1628
    %v1634 = vmul.f32 1.0, %v1633
    %v1635 = vtanh.pop %v1596
    %v1637 = vrot.slane %v1544, 6
    %v1639 = vmul.f32 %v1619, %v1637
    %v1640 = vmul.f32 %v1619, %v1635
    %1642 = vrot.lane.b32.xlu0 %v1640, 64
    %v1643 = vpop.permute.xlu0 %1642
    %v1645 = vadd.f32 %v1639, %v1643
    %v1646 = vtanh.pop %v1645
    %v1647 = vmul.f32 %v1634, %v1646
    %1649 = vrot.lane.b32.xlu0 %v1647, 64
    %v1650 = vpop.permute.xlu0 %1649
    %1652 = vst.msk [vmem:[#allocation3 + $0x18] sm:$0x30] %vm457, %v1650
    %1653 = vst.msk [vmem:[#allocation3 - $0x2] sm:$0x30] %vm459, %v1650
    %v1654 = vld [vmem:[#allocation2 + $0x30] sm:$0xc0]
    %v1655 = vld [vmem:[#allocation2 + $0x38] sm:$0xc0]
    %v1656 = vpack.c.bf16 %v1647, %v1647
    %v1658 = vrot.slane %v1656, 2
    %1659 = vrot.lane.b32.xlu0 %v1658, 64
    %v1660 = vpop.permute.xlu0 %1659
    %v1662 = vsel %vm168, %v1660, 0
    %1664 = vmatpush.bf16.msra.mxu0 0
    %1665 = vmatpush.bf16.msra.mxu0 0
    %1666 = vmatpush.bf16.msra.mxu0 0
    %1667 = vmatpush.bf16.msra.mxu0 0
    %1668 = vmatpush.bf16.msra.mxu0 %v158
    %1669 = vmatpush.bf16.msra.mxu0 %v156
    %1670 = vmatpush.bf16.msra.mxu0 %v154
    %1671 = vmatpush.bf16.msra.mxu0 %v152
    %1672 = vmatmul.bf16.gmra.mxu0 %v1662
    %v1673 = vpop.f32.mrf.mxu0
    %v1674 = vadd.f32 0.0, %v1673
    %v1675 = vpop.f32.mrf.mxu0
    %1676 = vdwg.mxu0
    %1677 = vmatpush.bf16.msra.mxu0 0
    %1678 = vmatpush.bf16.msra.mxu0 0
    %1679 = vmatpush.bf16.msra.mxu0 0
    %1680 = vmatpush.bf16.msra.mxu0 0
    %1681 = vmatpush.bf16.msra.mxu0 %v159
    %1682 = vmatpush.bf16.msra.mxu0 %v157
    %1683 = vmatpush.bf16.msra.mxu0 %v155
    %1684 = vmatpush.bf16.msra.mxu0 %v153
    %1685 = vmatmul.bf16.gmra.mxu0 %v1662
    %v1686 = vpop.f32.mrf.mxu0
    %v1687 = vadd.f32 0.0, %v1686
    %v1688 = vpop.f32.mrf.mxu0
    %1689 = vdwg.mxu0
    %v1692 = vrot.slane %v1674, 2
    %v1693 = vrot.slane %v1687, 2
    %v1696 = vadd.f32 %v1654, %v1692
    %v1697 = vadd.f32 %v1655, %v1693
    %v1698 = vxor.u32 %v1696, 2147483648
    %v1699 = vxor.u32 %v1697, 2147483648
    %v1700 = vmul.f32 %v1698, 1.442695
    %v1701 = vpow.pop %v1700
    %v1702 = vmul.f32 %v1699, 1.442695
    %v1703 = vpow.pop %v1702
    %v1704 = vadd.f32 %v1701, 1.0
    %v1705 = vadd.f32 %v1703, 1.0
    %v1706 = vrcp.pop %v1704
    %v1707 = vmul.f32 %v1704, %v1706
    %v1708 = vsub.f32 1.0, %v1707
    %v1709 = vmul.f32 %v1706, %v1708
    %v1710 = vadd.f32 %v1706, %v1709
    %vm1711 = vweird.f32 %v1704
    %vm1712 = vweird.f32 %v1706
    %vm1713 = vmor %vm1711, %vm1712
    %v1714 = vsel %vm1713, %v1706, %v1710
    %v1715 = vand.u32 2147483647, %v1704
    %vm1716 = vcmp.eq.f32.partialorder %v1715, 8.507059e+37
    %v1717 = vand.u32 %v1704, 2147483648
    %v1718 = vor.u32 1.1754944e-38, %v1717
    %v1719 = vsel %vm1716, %v1718, %v1714
    %v1720 = vmul.f32 1.0, %v1719
    %v1721 = vrcp.pop %v1705
    %v1722 = vmul.f32 %v1705, %v1721
    %v1723 = vsub.f32 1.0, %v1722
    %v1724 = vmul.f32 %v1721, %v1723
    %v1725 = vadd.f32 %v1721, %v1724
    %vm1726 = vweird.f32 %v1705
    %vm1727 = vweird.f32 %v1721
    %vm1728 = vmor %vm1726, %vm1727
    %v1729 = vsel %vm1728, %v1721, %v1725
    %v1730 = vand.u32 2147483647, %v1705
    %vm1731 = vcmp.eq.f32.partialorder %v1730, 8.507059e+37
    %v1732 = vand.u32 %v1705, 2147483648
    %v1733 = vor.u32 1.1754944e-38, %v1732
    %v1734 = vsel %vm1731, %v1733, %v1729
    %v1735 = vmul.f32 1.0, %v1734
    %v1736 = vtanh.pop %v1697
    %v1738 = vrot.slane %v1645, 6
    %v1740 = vmul.f32 %v1720, %v1738
    %v1741 = vmul.f32 %v1720, %v1736
    %1743 = vrot.lane.b32.xlu0 %v1741, 64
    %v1744 = vpop.permute.xlu0 %1743
    %v1746 = vadd.f32 %v1740, %v1744
    %v1747 = vtanh.pop %v1746
    %v1748 = vmul.f32 %v1735, %v1747
    %1750 = vrot.lane.b32.xlu0 %v1748, 64
    %v1751 = vpop.permute.xlu0 %1750
    %1753 = vst.msk [vmem:[#allocation3 + $0x18] sm:$0xc0] %vm560, %v1751
    %1754 = vst.msk [vmem:[#allocation3 - $0x6] sm:$0xc0] %vm562, %v1751
    %v1755 = vld [vmem:[#allocation3] sm:$0xff]
    %v1756 = vld [vmem:[#allocation3 + $0x8] sm:$0xff]
    %v1757 = vld [vmem:[#allocation3 + $0x10] sm:$0xff]
    %v1758 = vld [vmem:[#allocation3 + $0x18] sm:$0xff]
    %v1759 = vld [vmem:[%s4] sm:$0xff]
    %v1760 = vld [vmem:[%s4 + $0x8] sm:$0xff]
    %v1761 = vld [vmem:[%s4 + $0x10] sm:$0xff]
    %v1762 = vld [vmem:[%s4 + $0x18] sm:$0xff]
    %v1763 = vld [vmem:[%s4 + $0x20] sm:$0xff]
    %v1764 = vld [vmem:[%s4 + $0x28] sm:$0xff]
    %v1765 = vld [vmem:[%s4 + $0x30] sm:$0xff]
    %v1766 = vld [vmem:[%s4 + $0x38] sm:$0xff]
    %v1767 = vld [vmem:[%s5] sm:$0x1]
    %v1769 = vperm.slane %v1767, 0
    %v1772 = vsel %vm168, %v1755, 0
    %v1775 = vsel %vm168, %v1756, 0
    %v1778 = vsel %vm168, %v1757, 0
    %v1781 = vsel %vm168, %v1758, 0
    %1783 = vmatpush.msra.mxu0 0.0
    %1784 = vmatpush.msra.mxu0 0.0
    %1785 = vmatpush.msra.mxu0 0.0
    %1786 = vmatpush.msra.mxu0 0.0
    %1787 = vmatpush.msra.mxu0 0.0
    %1788 = vmatpush.msra.mxu0 0.0
    %1789 = vmatpush.msra.mxu0 0.0
    %1790 = vmatpush.msra.mxu0 0.0
    %1791 = vmatpush.msra.mxu0 %v1766
    %1792 = vmatpush.msra.mxu0 %v1765
    %1793 = vmatpush.msra.mxu0 %v1764
    %1794 = vmatpush.msra.mxu0 %v1763
    %1795 = vmatpush.msra.mxu0 %v1762
    %1796 = vmatpush.msra.mxu0 %v1761
    %1797 = vmatpush.msra.mxu0 %v1760
    %1798 = vmatpush.msra.mxu0 %v1759
    %1799 = vmatmul.f32.gmra.mxu0 %v1772
    %v1800 = vpop.f32.mrf.mxu0
    %v1801 = vadd.f32 %v1769, %v1800
    %1802 = vmatmul.f32.gmra.mxu0 %v1775
    %v1803 = vpop.f32.mrf.mxu0
    %v1804 = vadd.f32 %v1769, %v1803
    %1805 = vmatmul.f32.gmra.mxu0 %v1778
    %v1806 = vpop.f32.mrf.mxu0
    %v1807 = vadd.f32 %v1769, %v1806
    %1808 = vmatmul.f32.gmra.mxu0 %v1781
    %v1809 = vpop.f32.mrf.mxu0
    %v1810 = vadd.f32 %v1769, %v1809
    %1811 = vdwg.mxu0
    %v1812 = vmax.f32 %v1801, %v1807
    %v1813 = vmax.f32 %v1804, %v1810
    %v1814 = vmax.f32 %v1812, %v1813
    %v1816 = vrot.slane %v1814, 4
    %v1818 = vmax.f32 %v1814, %v1816
    %v1820 = vrot.slane %v1818, 2
    %v1822 = vmax.f32 %v1818, %v1820
    %1823 = vst.msk [vmem:[#allocation4] sm:$0x3] %vm252, %v1822
    // Predicated region
    $region26: #{lstmnet_forward.1} parent=1 // pred_check
      _
    $region27: #{lstmnet_forward.1} parent=1 // pred_check_branch
      %1825 = sbr.rel (0) target = $region29
    $region28: #{lstmnet_forward.1} parent=1 // pred_region
      %1827 = vsyncadd [#allocation5], 0
      %s1829 = sshll.u32 [#allocation4], 4
      %s1830 = int_to_ptr.vmem [resolvable:$true] %s1829
      %s1831 = sshll.u32 %s6, 4
      %s1832 = int_to_ptr.hbm [resolvable:$true] %s1831
      %1834 = dma.vmem_to_hbm [thread:$0]  %s1830, 32, %s1832, [#allocation5]
    $region29: #{lstmnet_forward.1} parent=1 // pred_fallthru
      _
    // Predicated region
    $region30: #{lstmnet_forward.1} parent=1 // pred_check
      _
    $region31: #{lstmnet_forward.1} parent=1 // pred_check_branch
      %1836 = sbr.rel (0) target = $region33
    $region32: #{lstmnet_forward.1} parent=1 // pred_region
      %1838 = dma.done [#allocation5], 32
    $region33: #{lstmnet_forward.1} parent=1 // pred_fallthru
      _
    %1839 = vsyncpa [#allocation5], 1

</llo_original>
